<compile_context>
chip_gen: v7x
topology: tpu7x:2x2x1
jax: 0.10.0
libtpu: 0.0.40
codegen_flags: <defaults>
</compile_context>

<pallas_src>
import functools

import jax
import jax.numpy as jnp
import numpy as np
from jax.experimental import pallas as pl
from jax.experimental.pallas import tpu as pltpu

C_XV = 6                    # x_v channels
C_A = 3                     # external-force channels
# dxi(3) + di(6) + dxj(3) + dj(6) + 3 log planes + a(3) + a_norm(3) = 27
C_IN = 3 + C_XV + 3 + C_XV + 3 + C_A + C_A
C_MID = 32
C_OUT = 5                   # 3 + 2 classes
L_0 = 0.1                   # TODO(synk): external params.L_0


def cloth_kernel(logs_ref, xv_ref, a_ref, col_ref,
                 w1_ref, b1_ref, w2_ref, b2_ref, out_ref, *, h, w, l0):
    hw = h * w
    b = pl.program_id(0)

    xv = xv_ref[0]                      # (6, HW)  spatial on lanes
    a = a_ref[0]                        # (3, HW)
    col = col_ref[...]                  # (1, HW)  column index j of each pixel

    # Boundary predicates (row predicates only need the flat index).
    idx = jax.lax.broadcasted_iota(jnp.int32, (1, hw), 1)
    row_ge1 = idx >= w                  # i >= 1
    row_ltm = idx < (h - 1) * w         # i <  h-1
    col_ge1 = col >= 1                  # j >= 1
    col_ltm = col < (w - 1)             # j <  w-1

    # Finite differences, zero on the trailing edge (matches torch.cat+zeros).
    xv_dn = pltpu.roll(xv, shift=hw - w, axis=1)      # [p] -> xv[p + W]
    xv_rt = pltpu.roll(xv, shift=hw - 1, axis=1)      # [p] -> xv[p + 1]
    di = jnp.where(row_ltm, xv_dn - xv, 0.0)          # (6, HW)
    dj = jnp.where(col_ltm, xv_rt - xv, 0.0)          # (6, HW)

    def l1_normalize(x):                # F.normalize(x, p=1) over channel dim
        n = jnp.sum(jnp.abs(x), axis=0, keepdims=True)
        return x / jnp.maximum(n, 1e-12)

    di3 = di[0:3]
    dj3 = dj[0:3]
    dxi = di3 - l0 * l1_normalize(di3)
    dxj = dj3 - l0 * l1_normalize(dj3)
    a_norm = l1_normalize(a)

    # Per-batch material parameters live in SMEM (scalar prefetch).
    log_s = logs_ref[b, 0]
    log_sh = logs_ref[b, 1]
    log_bd = logs_ref[b, 2]

    feat = jnp.concatenate(
        [dxi, di, dxj, dj,
         jnp.full((1, hw), log_s, jnp.float32),
         jnp.full((1, hw), log_sh, jnp.float32),
         jnp.full((1, hw), log_bd, jnp.float32),
         a, a_norm], axis=0)                          # (27, HW)

    row_ok = {-1: row_ge1, 0: None, 1: row_ltm}
    col_ok = {-1: col_ge1, 0: None, 1: col_ltm}

    # Stand-in model: 3x3 conv (pad=1, 27->32) -> ReLU -> 1x1 conv (32->5).
    # Nine taps accumulated as (32,27)@(27,HW) matmuls; N = HW keeps MXU full.
    acc = jnp.zeros((C_MID, hw), jnp.float32)
    k = 0
    for dy in (-1, 0, 1):
        for dx in (-1, 0, 1):
            s = dy * w + dx
            if s == 0:
                shifted = feat
            else:
                rolled = pltpu.roll(feat, shift=(-s) % hw, axis=1)
                rmask, cmask = row_ok[dy], col_ok[dx]
                mask = (rmask if cmask is None else
                        cmask if rmask is None else
                        jnp.logical_and(rmask, cmask))
                shifted = jnp.where(mask, rolled, 0.0)
            acc = acc + jnp.dot(w1_ref[k], shifted,
                                preferred_element_type=jnp.float32)
            k += 1

    h1 = jnp.maximum(acc + b1_ref[...], 0.0)                           # (32, HW)
    out5 = jnp.dot(w2_ref[...], h1,
                   preferred_element_type=jnp.float32) + b2_ref[...]   # (5, HW)

    # gated output: 10*tanh(x0:3/10)*sigmoid(x3) + a*sigmoid(x4)
    y = (10.0 * jnp.tanh(out5[0:3] / 10.0) * jax.nn.sigmoid(out5[3:4])
         + a * jax.nn.sigmoid(out5[4:5]))
    out_ref[0] = y.astype(out_ref.dtype)                               # lane-dense (3, HW)


def cloth_net_forward(params, x_v, stiffnesses, shearings, bendings, a, l0=L_0):
    """x_v: (bs, 6, h, w) NCHW, a: (bs, 3, h, w) NCHW, material scalars: (bs,)."""
    bs, c, h, w = x_v.shape
    assert c == C_XV
    hw = h * w

    # Channels-on-sublane / spatial-on-lane: plain reshapes, no transposes.
    xv_flat = x_v.reshape(bs, C_XV, hw).astype(jnp.float32)
    a_flat = a.reshape(bs, C_A, hw).astype(jnp.float32)
    logs = jnp.stack([jnp.log(stiffnesses), jnp.log(shearings), jnp.log(bendings)],
                     axis=-1).astype(jnp.float32)                       # (bs, 3)
    col_ids = (jnp.arange(hw, dtype=jnp.int32) % w).reshape(1, hw)

    # Re-orient weights once; constant index maps keep them VMEM-resident.
    w1_t = jnp.transpose(params["w1"], (0, 2, 1)).astype(jnp.float32)   # (9, 32, 27)
    b1_t = params["b1"].reshape(C_MID, 1).astype(jnp.float32)           # (32, 1)
    w2_t = jnp.transpose(params["w2"]).astype(jnp.float32)              # (5, 32)
    b2_t = params["b2"].reshape(C_OUT, 1).astype(jnp.float32)           # (5, 1)

    kernel = functools.partial(cloth_kernel, h=h, w=w, l0=float(l0))

    out_flat = pl.pallas_call(
        kernel,
        out_shape=jax.ShapeDtypeStruct((bs, 3, hw), jnp.float32),
        grid_spec=pltpu.PrefetchScalarGridSpec(
            num_scalar_prefetch=1,
            grid=(bs,),
            in_specs=[
                pl.BlockSpec((1, C_XV, hw), lambda b, s: (b, 0, 0)),
                pl.BlockSpec((1, C_A, hw), lambda b, s: (b, 0, 0)),
                pl.BlockSpec((1, hw), lambda b, s: (0, 0)),
                pl.BlockSpec((9, C_MID, C_IN), lambda b, s: (0, 0, 0)),
                pl.BlockSpec((C_MID, 1), lambda b, s: (0, 0)),
                pl.BlockSpec((C_OUT, C_MID), lambda b, s: (0, 0)),
                pl.BlockSpec((C_OUT, 1), lambda b, s: (0, 0)),
            ],
            out_specs=pl.BlockSpec((1, 3, hw), lambda b, s: (b, 0, 0)),
        ),
        compiler_params=pltpu.CompilerParams(
            dimension_semantics=("parallel",),
            vmem_limit_bytes=64 * 1024 * 1024,
        ),
    )(logs, xv_flat, a_flat, col_ids, w1_t, b1_t, w2_t, b2_t)

    return out_flat.reshape(bs, 3, h, w)


def reference_forward(params, x_v, stiff, shear, bend, a, l0=L_0):
    """Pure-JAX reference of the exact same semantics (for verification)."""
    bs, c, h, w = x_v.shape
    f32 = jnp.float32
    x_v = x_v.astype(f32)
    a = a.astype(f32)
    di = jnp.concatenate([x_v[:, :, 1:] - x_v[:, :, :-1],
                          jnp.zeros((bs, c, 1, w), f32)], axis=2)
    dj = jnp.concatenate([x_v[:, :, :, 1:] - x_v[:, :, :, :-1],
                          jnp.zeros((bs, c, h, 1), f32)], axis=3)

    def l1n(x):
        return x / jnp.maximum(jnp.sum(jnp.abs(x), axis=1, keepdims=True), 1e-12)

    dxi = di[:, :3]
    dxi = dxi - l0 * l1n(dxi)
    dxj = dj[:, :3]
    dxj = dxj - l0 * l1n(dxj)
    a_norm = l1n(a)
    ones = jnp.ones((1, 1, h, w), f32)
    x = jnp.concatenate([
        dxi, di, dxj, dj,
        jnp.log(stiff)[:, None, None, None] * ones,
        jnp.log(shear)[:, None, None, None] * ones,
        jnp.log(bend)[:, None, None, None] * ones,
        a, a_norm], axis=1)                                   # (bs, 27, h, w)

    # stand-in model (NHWC): 3x3 conv (pad=1) -> ReLU -> 1x1 conv
    feat = jnp.transpose(x, (0, 2, 3, 1))
    w1, b1, w2, b2 = params["w1"], params["b1"], params["w2"], params["b2"]
    pad = jnp.pad(feat, ((0, 0), (1, 1), (1, 1), (0, 0)))
    acc = jnp.zeros((bs, h, w, C_MID), f32)
    k = 0
    for dy in (-1, 0, 1):
        for dx in (-1, 0, 1):
            shifted = pad[:, 1 + dy:1 + dy + h, 1 + dx:1 + dx + w, :]
            acc = acc + jnp.einsum('bhwc,cd->bhwd', shifted, w1[k])
            k += 1
    h1 = jnp.maximum(acc + b1.reshape(1, 1, 1, C_MID), 0.0)
    out5 = jnp.einsum('bhwc,cd->bhwd', h1, w2) + b2.reshape(1, 1, 1, C_OUT)
    a_nhwc = jnp.transpose(a, (0, 2, 3, 1))
    y = (10.0 * jnp.tanh(out5[..., 0:3] / 10.0) * jax.nn.sigmoid(out5[..., 3:4])
         + a_nhwc * jax.nn.sigmoid(out5[..., 4:5]))
    return jnp.transpose(y, (0, 3, 1, 2))


if __name__ == "__main__":
    key = jax.random.PRNGKey(0)
    kx, ka, ks1, ks2, ks3, kw1, kw2 = jax.random.split(key, 7)

    bs, h, w = 2, 16, 16
    x_v = jax.random.normal(kx, (bs, C_XV, h, w), jnp.float32)
    a = jax.random.normal(ka, (bs, C_A, h, w), jnp.float32)
    stiffnesses = jax.random.uniform(ks1, (bs,), jnp.float32, 0.5, 2.0)
    shearings = jax.random.uniform(ks2, (bs,), jnp.float32, 0.5, 2.0)
    bendings = jax.random.uniform(ks3, (bs,), jnp.float32, 0.5, 2.0)

    params = {
        "w1": jax.random.normal(kw1, (9, C_IN, C_MID), jnp.float32) * 0.1,
        "b1": jnp.zeros((1, C_MID), jnp.float32),
        "w2": jax.random.normal(kw2, (C_MID, C_OUT), jnp.float32) * 0.1,
        "b2": jnp.zeros((1, C_OUT), jnp.float32),
    }

    out = cloth_net_forward(params, x_v, stiffnesses, shearings, bendings, a)
    out = jax.block_until_ready(out)
    assert out.shape == (bs, 3, h, w)

    ref = reference_forward(params, x_v, stiffnesses, shearings, bendings, a)
    np.testing.assert_allclose(np.asarray(out), np.asarray(ref),
                               rtol=2e-2, atol=2e-2)
    print("KERNEL_OK")
</pallas_src>

<mosaic_0001>
module attributes {stable_mosaic.version = 11 : i64} {
  func.func @cloth_kernel(%arg0: i32, %arg1: memref<2x3xf32, #tpu.memory_space<smem>>, %arg2: memref<1x6x256xf32, #tpu.memory_space<vmem>>, %arg3: memref<1x3x256xf32, #tpu.memory_space<vmem>>, %arg4: memref<1x256xi32, #tpu.memory_space<vmem>>, %arg5: memref<9x32x27xf32, #tpu.memory_space<vmem>>, %arg6: memref<32x1xf32, #tpu.memory_space<vmem>>, %arg7: memref<5x32xf32, #tpu.memory_space<vmem>>, %arg8: memref<5x1xf32, #tpu.memory_space<vmem>>, %arg9: memref<1x3x256xf32, #tpu.memory_space<vmem>>) attributes {dimension_semantics = [#tpu.dimension_semantics<parallel>], iteration_bounds = array<i64: 2>, scalar_prefetch = 1 : i64, scratch_operands = 0 : i64, tpu.core_type = #tpu.core_type<tc>, window_params = [{transform_indices = @transform_0, window_bounds = array<i64: 1, 6, 256>}, {transform_indices = @transform_1, window_bounds = array<i64: 1, 3, 256>}, {pipeline_mode = #tpu.pipeline_mode<synchronous>, transform_indices = @transform_2, window_bounds = array<i64: 1, 256>}, {pipeline_mode = #tpu.pipeline_mode<synchronous>, transform_indices = @transform_3, window_bounds = array<i64: 9, 32, 27>}, {pipeline_mode = #tpu.pipeline_mode<synchronous>, transform_indices = @transform_4, window_bounds = array<i64: 32, 1>}, {pipeline_mode = #tpu.pipeline_mode<synchronous>, transform_indices = @transform_5, window_bounds = array<i64: 5, 32>}, {pipeline_mode = #tpu.pipeline_mode<synchronous>, transform_indices = @transform_6, window_bounds = array<i64: 5, 1>}, {transform_indices = @transform_7, window_bounds = array<i64: 1, 3, 256>}]} {
    %c0 = arith.constant 0 : index
    %c0_0 = arith.constant 0 : index
    %c0_1 = arith.constant 0 : index
    %0 = vector.load %arg2[%c0, %c0_0, %c0_1] : memref<1x6x256xf32, #tpu.memory_space<vmem>>, vector<1x6x256xf32>
    %1 = vector.shape_cast %0 : vector<1x6x256xf32> to vector<6x256xf32>
    %c0_2 = arith.constant 0 : index
    %c0_3 = arith.constant 0 : index
    %c0_4 = arith.constant 0 : index
    %2 = vector.load %arg3[%c0_2, %c0_3, %c0_4] : memref<1x3x256xf32, #tpu.memory_space<vmem>>, vector<1x3x256xf32>
    %3 = vector.shape_cast %2 : vector<1x3x256xf32> to vector<3x256xf32>
    %c0_5 = arith.constant 0 : index
    %c0_6 = arith.constant 0 : index
    %4 = vector.load %arg4[%c0_5, %c0_6] : memref<1x256xi32, #tpu.memory_space<vmem>>, vector<1x256xi32>
    %5 = tpu.iota {dimensions = array<i32: 1>} : vector<1x256xi32>
    %c16_i32 = arith.constant 16 : i32
    %6 = vector.broadcast %c16_i32 : i32 to vector<1x256xi32>
    %7 = arith.cmpi sge, %5, %6 : vector<1x256xi32>
    %c240_i32 = arith.constant 240 : i32
    %8 = vector.broadcast %c240_i32 : i32 to vector<1x256xi32>
    %9 = arith.cmpi slt, %5, %8 : vector<1x256xi32>
    %c1_i32 = arith.constant 1 : i32
    %10 = vector.broadcast %c1_i32 : i32 to vector<1x256xi32>
    %11 = arith.cmpi sge, %4, %10 : vector<1x256xi32>
    %c15_i32 = arith.constant 15 : i32
    %12 = vector.broadcast %c15_i32 : i32 to vector<1x256xi32>
    %13 = arith.cmpi slt, %4, %12 : vector<1x256xi32>
    %c240_i32_7 = arith.constant 240 : i32
    %14 = tpu.dynamic_rotate %1 by %c240_i32_7 dim 1 : vector<6x256xf32>, i32 -> vector<6x256xf32>
    %c255_i32 = arith.constant 255 : i32
    %15 = tpu.dynamic_rotate %1 by %c255_i32 dim 1 : vector<6x256xf32>, i32 -> vector<6x256xf32>
    %16 = arith.subf %14, %1 : vector<6x256xf32>
    %cst = arith.constant 0.000000e+00 : f32
    %17 = vector.shape_cast %9 : vector<1x256xi1> to vector<1x256xi1>
    %18 = vector.broadcast %17 : vector<1x256xi1> to vector<6x256xi1>
    %19 = vector.broadcast %cst : f32 to vector<6x256xf32>
    %20 = arith.select %18, %16, %19 : vector<6x256xi1>, vector<6x256xf32>
    %21 = arith.subf %15, %1 : vector<6x256xf32>
    %cst_8 = arith.constant 0.000000e+00 : f32
    %22 = vector.shape_cast %13 : vector<1x256xi1> to vector<1x256xi1>
    %23 = vector.broadcast %22 : vector<1x256xi1> to vector<6x256xi1>
    %24 = vector.broadcast %cst_8 : f32 to vector<6x256xf32>
    %25 = arith.select %23, %21, %24 : vector<6x256xi1>, vector<6x256xf32>
    %26 = vector.extract_strided_slice %20 {offsets = [0, 0], sizes = [3, 256], strides = [1, 1]} : vector<6x256xf32> to vector<3x256xf32>
    %27 = vector.extract_strided_slice %25 {offsets = [0, 0], sizes = [3, 256], strides = [1, 1]} : vector<6x256xf32> to vector<3x256xf32>
    %28 = math.absf %26 : vector<3x256xf32>
    %cst_9 = arith.constant dense<0.000000e+00> : vector<256xf32>
    %29 = vector.multi_reduction <add>, %28, %cst_9 [0] : vector<3x256xf32> to vector<256xf32>
    %30 = vector.shape_cast %29 : vector<256xf32> to vector<1x256xf32>
    %cst_10 = arith.constant 9.99999996E-13 : f32
    %31 = vector.broadcast %cst_10 : f32 to vector<1x256xf32>
    %32 = arith.maximumf %30, %31 : vector<1x256xf32>
    %33 = vector.broadcast %32 : vector<1x256xf32> to vector<3x256xf32>
    %34 = arith.divf %26, %33 : vector<3x256xf32>
    %cst_11 = arith.constant 1.000000e-01 : f32
    %35 = vector.broadcast %cst_11 : f32 to vector<3x256xf32>
    %36 = arith.mulf %35, %34 : vector<3x256xf32>
    %37 = arith.subf %26, %36 : vector<3x256xf32>
    %38 = math.absf %27 : vector<3x256xf32>
    %cst_12 = arith.constant dense<0.000000e+00> : vector<256xf32>
    %39 = vector.multi_reduction <add>, %38, %cst_12 [0] : vector<3x256xf32> to vector<256xf32>
    %40 = vector.shape_cast %39 : vector<256xf32> to vector<1x256xf32>
    %cst_13 = arith.constant 9.99999996E-13 : f32
    %41 = vector.broadcast %cst_13 : f32 to vector<1x256xf32>
    %42 = arith.maximumf %40, %41 : vector<1x256xf32>
    %43 = vector.broadcast %42 : vector<1x256xf32> to vector<3x256xf32>
    %44 = arith.divf %27, %43 : vector<3x256xf32>
    %cst_14 = arith.constant 1.000000e-01 : f32
    %45 = vector.broadcast %cst_14 : f32 to vector<3x256xf32>
    %46 = arith.mulf %45, %44 : vector<3x256xf32>
    %47 = arith.subf %27, %46 : vector<3x256xf32>
    %48 = math.absf %3 : vector<3x256xf32>
    %cst_15 = arith.constant dense<0.000000e+00> : vector<256xf32>
    %49 = vector.multi_reduction <add>, %48, %cst_15 [0] : vector<3x256xf32> to vector<256xf32>
    %50 = vector.shape_cast %49 : vector<256xf32> to vector<1x256xf32>
    %cst_16 = arith.constant 9.99999996E-13 : f32
    %51 = vector.broadcast %cst_16 : f32 to vector<1x256xf32>
    %52 = arith.maximumf %50, %51 : vector<1x256xf32>
    %53 = vector.broadcast %52 : vector<1x256xf32> to vector<3x256xf32>
    %54 = arith.divf %3, %53 : vector<3x256xf32>
    %55 = arith.index_cast %arg0 : i32 to index
    %c0_17 = arith.constant 0 : index
    %56 = memref.load %arg1[%55, %c0_17] : memref<2x3xf32, #tpu.memory_space<smem>>
    %57 = arith.index_cast %arg0 : i32 to index
    %c1 = arith.constant 1 : index
    %58 = memref.load %arg1[%57, %c1] : memref<2x3xf32, #tpu.memory_space<smem>>
    %59 = arith.index_cast %arg0 : i32 to index
    %c2 = arith.constant 2 : index
    %60 = memref.load %arg1[%59, %c2] : memref<2x3xf32, #tpu.memory_space<smem>>
    %61 = vector.broadcast %56 : f32 to vector<1x256xf32>
    %62 = vector.broadcast %58 : f32 to vector<1x256xf32>
    %63 = vector.broadcast %60 : f32 to vector<1x256xf32>
    %64 = tpu.concatenate %37, %20, %47, %25, %61, %62, %63, %3, %54 in 0 : vector<3x256xf32>, vector<6x256xf32>, vector<3x256xf32>, vector<6x256xf32>, vector<1x256xf32>, vector<1x256xf32>, vector<1x256xf32>, vector<3x256xf32>, vector<3x256xf32> -> vector<27x256xf32>
    %cst_18 = arith.constant 0.000000e+00 : f32
    %65 = vector.broadcast %cst_18 : f32 to vector<32x256xf32>
    %c17_i32 = arith.constant 17 : i32
    %66 = tpu.dynamic_rotate %64 by %c17_i32 dim 1 : vector<27x256xf32>, i32 -> vector<27x256xf32>
    %67 = arith.andi %7, %11 : vector<1x256xi1>
    %cst_19 = arith.constant 0.000000e+00 : f32
    %68 = vector.shape_cast %67 : vector<1x256xi1> to vector<1x256xi1>
    %69 = vector.broadcast %68 : vector<1x256xi1> to vector<27x256xi1>
    %70 = vector.broadcast %cst_19 : f32 to vector<27x256xf32>
    %71 = arith.select %69, %66, %70 : vector<27x256xi1>, vector<27x256xf32>
    %c0_20 = arith.constant 0 : index
    %c0_21 = arith.constant 0 : index
    %c0_22 = arith.constant 0 : index
    %72 = vector.load %arg5[%c0_20, %c0_21, %c0_22] : memref<9x32x27xf32, #tpu.memory_space<vmem>>, vector<1x32x27xf32>
    %73 = vector.shape_cast %72 : vector<1x32x27xf32> to vector<32x27xf32>
    %cst_23 = arith.constant dense<0.000000e+00> : vector<32x256xf32>
    %74 = tpu.matmul %73, %71, %cst_23 {dimension_numbers = #tpu.dot_dimension_numbers<[1], [0], [0], [1], [0, 0, 1, 1], [], []>} : vector<32x27xf32>, vector<27x256xf32>, vector<32x256xf32> -> vector<32x256xf32>
    %75 = arith.addf %65, %74 : vector<32x256xf32>
    %c16_i32_24 = arith.constant 16 : i32
    %76 = tpu.dynamic_rotate %64 by %c16_i32_24 dim 1 : vector<27x256xf32>, i32 -> vector<27x256xf32>
    %cst_25 = arith.constant 0.000000e+00 : f32
    %77 = vector.shape_cast %7 : vector<1x256xi1> to vector<1x256xi1>
    %78 = vector.broadcast %77 : vector<1x256xi1> to vector<27x256xi1>
    %79 = vector.broadcast %cst_25 : f32 to vector<27x256xf32>
    %80 = arith.select %78, %76, %79 : vector<27x256xi1>, vector<27x256xf32>
    %c1_26 = arith.constant 1 : index
    %c0_27 = arith.constant 0 : index
    %c0_28 = arith.constant 0 : index
    %81 = vector.load %arg5[%c1_26, %c0_27, %c0_28] : memref<9x32x27xf32, #tpu.memory_space<vmem>>, vector<1x32x27xf32>
    %82 = vector.shape_cast %81 : vector<1x32x27xf32> to vector<32x27xf32>
    %cst_29 = arith.constant dense<0.000000e+00> : vector<32x256xf32>
    %83 = tpu.matmul %82, %80, %cst_29 {dimension_numbers = #tpu.dot_dimension_numbers<[1], [0], [0], [1], [0, 0, 1, 1], [], []>} : vector<32x27xf32>, vector<27x256xf32>, vector<32x256xf32> -> vector<32x256xf32>
    %84 = arith.addf %75, %83 : vector<32x256xf32>
    %c15_i32_30 = arith.constant 15 : i32
    %85 = tpu.dynamic_rotate %64 by %c15_i32_30 dim 1 : vector<27x256xf32>, i32 -> vector<27x256xf32>
    %86 = arith.andi %7, %13 : vector<1x256xi1>
    %cst_31 = arith.constant 0.000000e+00 : f32
    %87 = vector.shape_cast %86 : vector<1x256xi1> to vector<1x256xi1>
    %88 = vector.broadcast %87 : vector<1x256xi1> to vector<27x256xi1>
    %89 = vector.broadcast %cst_31 : f32 to vector<27x256xf32>
    %90 = arith.select %88, %85, %89 : vector<27x256xi1>, vector<27x256xf32>
    %c2_32 = arith.constant 2 : index
    %c0_33 = arith.constant 0 : index
    %c0_34 = arith.constant 0 : index
    %91 = vector.load %arg5[%c2_32, %c0_33, %c0_34] : memref<9x32x27xf32, #tpu.memory_space<vmem>>, vector<1x32x27xf32>
    %92 = vector.shape_cast %91 : vector<1x32x27xf32> to vector<32x27xf32>
    %cst_35 = arith.constant dense<0.000000e+00> : vector<32x256xf32>
    %93 = tpu.matmul %92, %90, %cst_35 {dimension_numbers = #tpu.dot_dimension_numbers<[1], [0], [0], [1], [0, 0, 1, 1], [], []>} : vector<32x27xf32>, vector<27x256xf32>, vector<32x256xf32> -> vector<32x256xf32>
    %94 = arith.addf %84, %93 : vector<32x256xf32>
    %c1_i32_36 = arith.constant 1 : i32
    %95 = tpu.dynamic_rotate %64 by %c1_i32_36 dim 1 : vector<27x256xf32>, i32 -> vector<27x256xf32>
    %cst_37 = arith.constant 0.000000e+00 : f32
    %96 = vector.shape_cast %11 : vector<1x256xi1> to vector<1x256xi1>
    %97 = vector.broadcast %96 : vector<1x256xi1> to vector<27x256xi1>
    %98 = vector.broadcast %cst_37 : f32 to vector<27x256xf32>
    %99 = arith.select %97, %95, %98 : vector<27x256xi1>, vector<27x256xf32>
    %c3 = arith.constant 3 : index
    %c0_38 = arith.constant 0 : index
    %c0_39 = arith.constant 0 : index
    %100 = vector.load %arg5[%c3, %c0_38, %c0_39] : memref<9x32x27xf32, #tpu.memory_space<vmem>>, vector<1x32x27xf32>
    %101 = vector.shape_cast %100 : vector<1x32x27xf32> to vector<32x27xf32>
    %cst_40 = arith.constant dense<0.000000e+00> : vector<32x256xf32>
    %102 = tpu.matmul %101, %99, %cst_40 {dimension_numbers = #tpu.dot_dimension_numbers<[1], [0], [0], [1], [0, 0, 1, 1], [], []>} : vector<32x27xf32>, vector<27x256xf32>, vector<32x256xf32> -> vector<32x256xf32>
    %103 = arith.addf %94, %102 : vector<32x256xf32>
    %c4 = arith.constant 4 : index
    %c0_41 = arith.constant 0 : index
    %c0_42 = arith.constant 0 : index
    %104 = vector.load %arg5[%c4, %c0_41, %c0_42] : memref<9x32x27xf32, #tpu.memory_space<vmem>>, vector<1x32x27xf32>
    %105 = vector.shape_cast %104 : vector<1x32x27xf32> to vector<32x27xf32>
    %cst_43 = arith.constant dense<0.000000e+00> : vector<32x256xf32>
    %106 = tpu.matmul %105, %64, %cst_43 {dimension_numbers = #tpu.dot_dimension_numbers<[1], [0], [0], [1], [0, 0, 1, 1], [], []>} : vector<32x27xf32>, vector<27x256xf32>, vector<32x256xf32> -> vector<32x256xf32>
    %107 = arith.addf %103, %106 : vector<32x256xf32>
    %c255_i32_44 = arith.constant 255 : i32
    %108 = tpu.dynamic_rotate %64 by %c255_i32_44 dim 1 : vector<27x256xf32>, i32 -> vector<27x256xf32>
    %cst_45 = arith.constant 0.000000e+00 : f32
    %109 = vector.shape_cast %13 : vector<1x256xi1> to vector<1x256xi1>
    %110 = vector.broadcast %109 : vector<1x256xi1> to vector<27x256xi1>
    %111 = vector.broadcast %cst_45 : f32 to vector<27x256xf32>
    %112 = arith.select %110, %108, %111 : vector<27x256xi1>, vector<27x256xf32>
    %c5 = arith.constant 5 : index
    %c0_46 = arith.constant 0 : index
    %c0_47 = arith.constant 0 : index
    %113 = vector.load %arg5[%c5, %c0_46, %c0_47] : memref<9x32x27xf32, #tpu.memory_space<vmem>>, vector<1x32x27xf32>
    %114 = vector.shape_cast %113 : vector<1x32x27xf32> to vector<32x27xf32>
    %cst_48 = arith.constant dense<0.000000e+00> : vector<32x256xf32>
    %115 = tpu.matmul %114, %112, %cst_48 {dimension_numbers = #tpu.dot_dimension_numbers<[1], [0], [0], [1], [0, 0, 1, 1], [], []>} : vector<32x27xf32>, vector<27x256xf32>, vector<32x256xf32> -> vector<32x256xf32>
    %116 = arith.addf %107, %115 : vector<32x256xf32>
    %c241_i32 = arith.constant 241 : i32
    %117 = tpu.dynamic_rotate %64 by %c241_i32 dim 1 : vector<27x256xf32>, i32 -> vector<27x256xf32>
    %118 = arith.andi %9, %11 : vector<1x256xi1>
    %cst_49 = arith.constant 0.000000e+00 : f32
    %119 = vector.shape_cast %118 : vector<1x256xi1> to vector<1x256xi1>
    %120 = vector.broadcast %119 : vector<1x256xi1> to vector<27x256xi1>
    %121 = vector.broadcast %cst_49 : f32 to vector<27x256xf32>
    %122 = arith.select %120, %117, %121 : vector<27x256xi1>, vector<27x256xf32>
    %c6 = arith.constant 6 : index
    %c0_50 = arith.constant 0 : index
    %c0_51 = arith.constant 0 : index
    %123 = vector.load %arg5[%c6, %c0_50, %c0_51] : memref<9x32x27xf32, #tpu.memory_space<vmem>>, vector<1x32x27xf32>
    %124 = vector.shape_cast %123 : vector<1x32x27xf32> to vector<32x27xf32>
    %cst_52 = arith.constant dense<0.000000e+00> : vector<32x256xf32>
    %125 = tpu.matmul %124, %122, %cst_52 {dimension_numbers = #tpu.dot_dimension_numbers<[1], [0], [0], [1], [0, 0, 1, 1], [], []>} : vector<32x27xf32>, vector<27x256xf32>, vector<32x256xf32> -> vector<32x256xf32>
    %126 = arith.addf %116, %125 : vector<32x256xf32>
    %c240_i32_53 = arith.constant 240 : i32
    %127 = tpu.dynamic_rotate %64 by %c240_i32_53 dim 1 : vector<27x256xf32>, i32 -> vector<27x256xf32>
    %cst_54 = arith.constant 0.000000e+00 : f32
    %128 = vector.shape_cast %9 : vector<1x256xi1> to vector<1x256xi1>
    %129 = vector.broadcast %128 : vector<1x256xi1> to vector<27x256xi1>
    %130 = vector.broadcast %cst_54 : f32 to vector<27x256xf32>
    %131 = arith.select %129, %127, %130 : vector<27x256xi1>, vector<27x256xf32>
    %c7 = arith.constant 7 : index
    %c0_55 = arith.constant 0 : index
    %c0_56 = arith.constant 0 : index
    %132 = vector.load %arg5[%c7, %c0_55, %c0_56] : memref<9x32x27xf32, #tpu.memory_space<vmem>>, vector<1x32x27xf32>
    %133 = vector.shape_cast %132 : vector<1x32x27xf32> to vector<32x27xf32>
    %cst_57 = arith.constant dense<0.000000e+00> : vector<32x256xf32>
    %134 = tpu.matmul %133, %131, %cst_57 {dimension_numbers = #tpu.dot_dimension_numbers<[1], [0], [0], [1], [0, 0, 1, 1], [], []>} : vector<32x27xf32>, vector<27x256xf32>, vector<32x256xf32> -> vector<32x256xf32>
    %135 = arith.addf %126, %134 : vector<32x256xf32>
    %c239_i32 = arith.constant 239 : i32
    %136 = tpu.dynamic_rotate %64 by %c239_i32 dim 1 : vector<27x256xf32>, i32 -> vector<27x256xf32>
    %137 = arith.andi %9, %13 : vector<1x256xi1>
    %cst_58 = arith.constant 0.000000e+00 : f32
    %138 = vector.shape_cast %137 : vector<1x256xi1> to vector<1x256xi1>
    %139 = vector.broadcast %138 : vector<1x256xi1> to vector<27x256xi1>
    %140 = vector.broadcast %cst_58 : f32 to vector<27x256xf32>
    %141 = arith.select %139, %136, %140 : vector<27x256xi1>, vector<27x256xf32>
    %c8 = arith.constant 8 : index
    %c0_59 = arith.constant 0 : index
    %c0_60 = arith.constant 0 : index
    %142 = vector.load %arg5[%c8, %c0_59, %c0_60] : memref<9x32x27xf32, #tpu.memory_space<vmem>>, vector<1x32x27xf32>
    %143 = vector.shape_cast %142 : vector<1x32x27xf32> to vector<32x27xf32>
    %cst_61 = arith.constant dense<0.000000e+00> : vector<32x256xf32>
    %144 = tpu.matmul %143, %141, %cst_61 {dimension_numbers = #tpu.dot_dimension_numbers<[1], [0], [0], [1], [0, 0, 1, 1], [], []>} : vector<32x27xf32>, vector<27x256xf32>, vector<32x256xf32> -> vector<32x256xf32>
    %145 = arith.addf %135, %144 : vector<32x256xf32>
    %c0_62 = arith.constant 0 : index
    %c0_63 = arith.constant 0 : index
    %146 = vector.load %arg6[%c0_62, %c0_63] : memref<32x1xf32, #tpu.memory_space<vmem>>, vector<32x1xf32>
    %147 = vector.broadcast %146 : vector<32x1xf32> to vector<32x256xf32>
    %148 = arith.addf %145, %147 : vector<32x256xf32>
    %cst_64 = arith.constant 0.000000e+00 : f32
    %149 = vector.broadcast %cst_64 : f32 to vector<32x256xf32>
    %150 = arith.maximumf %148, %149 : vector<32x256xf32>
    %c0_65 = arith.constant 0 : index
    %c0_66 = arith.constant 0 : index
    %151 = vector.load %arg7[%c0_65, %c0_66] : memref<5x32xf32, #tpu.memory_space<vmem>>, vector<5x32xf32>
    %cst_67 = arith.constant dense<0.000000e+00> : vector<5x256xf32>
    %152 = tpu.matmul %151, %150, %cst_67 {dimension_numbers = #tpu.dot_dimension_numbers<[1], [0], [0], [1], [0, 0, 1, 1], [], []>} : vector<5x32xf32>, vector<32x256xf32>, vector<5x256xf32> -> vector<5x256xf32>
    %c0_68 = arith.constant 0 : index
    %c0_69 = arith.constant 0 : index
    %153 = vector.load %arg8[%c0_68, %c0_69] : memref<5x1xf32, #tpu.memory_space<vmem>>, vector<5x1xf32>
    %154 = vector.broadcast %153 : vector<5x1xf32> to vector<5x256xf32>
    %155 = arith.addf %152, %154 : vector<5x256xf32>
    %156 = vector.extract_strided_slice %155 {offsets = [0, 0], sizes = [3, 256], strides = [1, 1]} : vector<5x256xf32> to vector<3x256xf32>
    %cst_70 = arith.constant 1.000000e+01 : f32
    %157 = vector.broadcast %cst_70 : f32 to vector<3x256xf32>
    %158 = arith.divf %156, %157 : vector<3x256xf32>
    %159 = math.tanh %158 : vector<3x256xf32>
    %cst_71 = arith.constant 1.000000e+01 : f32
    %160 = vector.broadcast %cst_71 : f32 to vector<3x256xf32>
    %161 = arith.mulf %160, %159 : vector<3x256xf32>
    %162 = vector.extract_strided_slice %155 {offsets = [3, 0], sizes = [1, 256], strides = [1, 1]} : vector<5x256xf32> to vector<1x256xf32>
    %163 = arith.negf %162 : vector<1x256xf32>
    %164 = math.exp %163 : vector<1x256xf32>
    %cst_72 = arith.constant 1.000000e+00 : f32
    %165 = vector.broadcast %cst_72 : f32 to vector<1x256xf32>
    %166 = arith.addf %165, %164 : vector<1x256xf32>
    %167 = arith.divf %165, %166 : vector<1x256xf32>
    %168 = vector.broadcast %167 : vector<1x256xf32> to vector<3x256xf32>
    %169 = arith.mulf %161, %168 : vector<3x256xf32>
    %170 = vector.extract_strided_slice %155 {offsets = [4, 0], sizes = [1, 256], strides = [1, 1]} : vector<5x256xf32> to vector<1x256xf32>
    %171 = arith.negf %170 : vector<1x256xf32>
    %172 = math.exp %171 : vector<1x256xf32>
    %cst_73 = arith.constant 1.000000e+00 : f32
    %173 = vector.broadcast %cst_73 : f32 to vector<1x256xf32>
    %174 = arith.addf %173, %172 : vector<1x256xf32>
    %175 = arith.divf %173, %174 : vector<1x256xf32>
    %176 = vector.broadcast %175 : vector<1x256xf32> to vector<3x256xf32>
    %177 = arith.mulf %3, %176 : vector<3x256xf32>
    %178 = arith.addf %169, %177 : vector<3x256xf32>
    %c0_74 = arith.constant 0 : index
    %c0_75 = arith.constant 0 : index
    %c0_76 = arith.constant 0 : index
    %179 = vector.load %arg9[%c0_74, %c0_75, %c0_76] : memref<1x3x256xf32, #tpu.memory_space<vmem>>, vector<1x3x256xf32>
    %180 = vector.shape_cast %179 : vector<1x3x256xf32> to vector<3x256xf32>
    %181 = vector.shape_cast %178 : vector<3x256xf32> to vector<1x3x256xf32>
    tpu.vector_store %arg9[%c0_74, %c0_75, %c0_76], %181 {strides = array<i32>} : memref<1x3x256xf32, #tpu.memory_space<vmem>>, vector<1x3x256xf32>,
    return
  }
  func.func @transform_0(%arg0: i32, %arg1: memref<2x3xf32, #tpu.memory_space<smem>>) -> (i32, i32, i32) {
    %c0_i32 = arith.constant 0 : i32
    %c0_i32_0 = arith.constant 0 : i32
    %c0_i32_1 = arith.constant 0 : i32
    return %arg0, %c0_i32, %c0_i32_0 : i32, i32, i32
  }
  func.func @transform_1(%arg0: i32, %arg1: memref<2x3xf32, #tpu.memory_space<smem>>) -> (i32, i32, i32) {
    %c0_i32 = arith.constant 0 : i32
    %c0_i32_0 = arith.constant 0 : i32
    %c0_i32_1 = arith.constant 0 : i32
    return %arg0, %c0_i32, %c0_i32_0 : i32, i32, i32
  }
  func.func @transform_2(%arg0: i32, %arg1: memref<2x3xf32, #tpu.memory_space<smem>>) -> (i32, i32) {
    %c0_i32 = arith.constant 0 : i32
    %c0_i32_0 = arith.constant 0 : i32
    %c0_i32_1 = arith.constant 0 : i32
    return %c0_i32, %c0_i32_0 : i32, i32
  }
  func.func @transform_3(%arg0: i32, %arg1: memref<2x3xf32, #tpu.memory_space<smem>>) -> (i32, i32, i32) {
    %c0_i32 = arith.constant 0 : i32
    %c0_i32_0 = arith.constant 0 : i32
    %c0_i32_1 = arith.constant 0 : i32
    %c0_i32_2 = arith.constant 0 : i32
    return %c0_i32, %c0_i32_0, %c0_i32_1 : i32, i32, i32
  }
  func.func @transform_4(%arg0: i32, %arg1: memref<2x3xf32, #tpu.memory_space<smem>>) -> (i32, i32) {
    %c0_i32 = arith.constant 0 : i32
    %c0_i32_0 = arith.constant 0 : i32
    %c0_i32_1 = arith.constant 0 : i32
    return %c0_i32, %c0_i32_0 : i32, i32
  }
  func.func @transform_5(%arg0: i32, %arg1: memref<2x3xf32, #tpu.memory_space<smem>>) -> (i32, i32) {
    %c0_i32 = arith.constant 0 : i32
    %c0_i32_0 = arith.constant 0 : i32
    %c0_i32_1 = arith.constant 0 : i32
    return %c0_i32, %c0_i32_0 : i32, i32
  }
  func.func @transform_6(%arg0: i32, %arg1: memref<2x3xf32, #tpu.memory_space<smem>>) -> (i32, i32) {
    %c0_i32 = arith.constant 0 : i32
    %c0_i32_0 = arith.constant 0 : i32
    %c0_i32_1 = arith.constant 0 : i32
    return %c0_i32, %c0_i32_0 : i32, i32
  }
  func.func @transform_7(%arg0: i32, %arg1: memref<2x3xf32, #tpu.memory_space<smem>>) -> (i32, i32, i32) {
    %c0_i32 = arith.constant 0 : i32
    %c0_i32_0 = arith.constant 0 : i32
    %c0_i32_1 = arith.constant 0 : i32
    return %arg0, %c0_i32, %c0_i32_0 : i32, i32, i32
  }
}

</mosaic_0001>

<llo_original>
// kernel: tpu_custom_call.1
$region0: #{tpu_custom_call.1}
  #allocation0 [shape = 'u32[]', space=smem, size = 0x4, offset = 0x4, fixed_abs, tag = 'smem constant byte address 0x4 - core index']
  #allocation1 [shape = 'u32[144,128]{1,0:T(1,128)}', space=vmem, size = 0x12000, scoped, tag = 'internal scratch']
  #allocation2 [shape = 's32[1]{0}', space=sflag, size = 0x4, scoped, tag = 'scoped memory for tpu_custom_call.1']
  #allocation3 [shape = 'u8[1024]{0}', space=smem, size = 0x400, scoped, tag = 'prefetched SMEM operand 0']
  %s0 = inlined_call_operand.hbm [shape: f32[2,3], index: 0, kind: input, shape index: {}]
  %s1 = inlined_call_operand.hbm [shape: f32[2,6,256], index: 1, kind: input, shape index: {}]
  %s2 = inlined_call_operand.hbm [shape: f32[2,3,256], index: 2, kind: input, shape index: {}]
  %s3 = inlined_call_operand.hbm [shape: s32[1,256], index: 3, kind: input, shape index: {}]
  %s4 = inlined_call_operand.hbm [shape: f32[9,32,27], index: 4, kind: input, shape index: {}]
  %s5 = inlined_call_operand.hbm [shape: f32[32,1], index: 5, kind: input, shape index: {}]
  %s6 = inlined_call_operand.hbm [shape: f32[5,32], index: 6, kind: input, shape index: {}]
  %s7 = inlined_call_operand.hbm [shape: f32[5,1], index: 7, kind: input, shape index: {}]
  %s8 = inlined_call_operand.hbm [shape: f32[2,3,256], index: 8, kind: output, shape index: {}]
  %s9 = sld [smem:[#allocation0]]
  $region89: #{tpu_custom_call.1} parent=0
    _
  %s11 = ssub.s32 1, %s9
  %s12 = scalar_select 0, %s11, %s9
  %14 = dma.hbm_to_smem %s0, 32, [#allocation3], [#allocation2]
  %15 = dma.done [#allocation2], 32
  %16 = sfence
  $region1: #{tpu_custom_call.1} parent=0
    #allocation4 [shape = 'u8[16384]{0}', space=vmem, size = 0x4000, scoped, tag = 'input window, operand 1']
    #allocation5 [shape = 's32[2]{0}', space=sflag, size = 0x8, scoped, tag = 'scoped memory for tpu_custom_call.1']
    #allocation6 [shape = 's32[2]{0}', space=sflag, size = 0x8, scoped, tag = 'scoped memory for tpu_custom_call.1']
    #allocation7 [shape = 'u8[8192]{0}', space=vmem, size = 0x2000, scoped, tag = 'input window, operand 2']
    #allocation8 [shape = 's32[2]{0}', space=sflag, size = 0x8, scoped, tag = 'scoped memory for tpu_custom_call.1']
    #allocation9 [shape = 'u8[1024]{0}', space=vmem, size = 0x400, scoped, tag = 'input window, operand 3, single buffered']
    #allocation10 [shape = 'u8[147456]{0}', space=vmem, size = 0x24000, scoped, tag = 'input window, operand 4, single buffered']
    #allocation11 [shape = 's32[1]{0}', space=sflag, size = 0x4, scoped, tag = 'scoped memory for tpu_custom_call.1']
    #allocation12 [shape = 'u8[16384]{0}', space=vmem, size = 0x4000, scoped, tag = 'input window, operand 5, single buffered']
    #allocation13 [shape = 'u8[4096]{0}', space=vmem, size = 0x1000, scoped, tag = 'input window, operand 6, single buffered']
    #allocation14 [shape = 's32[1]{0}', space=sflag, size = 0x4, scoped, tag = 'scoped memory for tpu_custom_call.1']
    #allocation15 [shape = 'u8[4096]{0}', space=vmem, size = 0x1000, scoped, tag = 'input window, operand 7, single buffered']
    #allocation16 [shape = 'u8[8192]{0}', space=vmem, size = 0x2000, scoped, tag = 'output window, operand 0']
    %17 = vsyncpa [#allocation5], 0
    %s18 = scalar_lea.sflag [#allocation5], 1
    %19 = vsyncpa %s18, 0
    %20 = vsyncpa [#allocation8], 0
    %s21 = scalar_lea.sflag [#allocation8], 1
    %22 = vsyncpa %s21, 0
    %23 = vsyncpa [#allocation11], 0
    %24 = vsyncpa [#allocation14], 0
    %25 = vsyncpa [#allocation6], 0
    %s26 = scalar_lea.sflag [#allocation6], 1
    %27 = vsyncpa %s26, 0
    loop: start=0, step=1, limit=4
    $region2: #{tpu_custom_call.1} parent=1 // loop_pre_header
      _
    $region3: #{tpu_custom_call.1} parent=1 // loop_header
      %s29 = sphi 0, %s33
      %p30 = scmp.ge.s32.totalorder %s29, 4
      %s39 = sphi 0, %s41
      %s42 = sphi 0, %s39
      %s43 = sphi 0, %s42
      %s59 = sphi 0, %s43
      %s65 = sphi 0, %s67
      %s68 = sphi 0, %s65
      %s69 = sphi 0, %s68
      %s85 = sphi 0, %s69
      %s89 = sphi 0, %s89
      %s91 = sphi 0, %s89
      %s92 = sphi 0, %s91
      %s106 = sphi 0, %s92
      %s110 = sphi 0, %s110
      %s112 = sphi 0, %s110
      %s113 = sphi 0, %s112
      %s127 = sphi 0, %s113
      %s131 = sphi 0, %s131
      %s133 = sphi 0, %s131
      %s134 = sphi 0, %s133
      %s148 = sphi 0, %s134
      %s152 = sphi 0, %s152
      %s154 = sphi 0, %s152
      %s155 = sphi 0, %s154
      %s169 = sphi 0, %s155
      %s173 = sphi 0, %s173
      %s175 = sphi 0, %s173
      %s176 = sphi 0, %s175
      %s190 = sphi 0, %s176
      %s196 = sphi 0, %s198
      %s199 = sphi 0, %s196
      %s200 = sphi 0, %s199
      %s216 = sphi 0, %s200
    $region4: #{tpu_custom_call.1} parent=1 // loop_header_branch
      %32 = sbr.rel (%p30) target = $region8
    $region5: #{tpu_custom_call.1} parent=1 // loop_body
      %s34 = ssub.s32 %s29, 1
      %s35 = ssub.s32 %s29, 2
      %s36 = sadd.s32 %s29, 1
      %s37 = ssub.s32 %s29, %s36
      %p38 = scmp.eq.s32.totalorder %s37, 0
      %s40 = sadd.s32 %s39, 1
      %s41 = scalar_select %p38, %s39, %s40
      %p44 = pneg %p38
      %p45 = scmp.eq.s32.totalorder %s29, 1
      %p46 = por %p44, %p45
      %p47 = scmp.ne.s32.totalorder %s39, %s42
      %p48 = scmp.eq.s32.totalorder %s29, 0
      %p49 = por %p47, %p48
      %p50 = scmp.ne.s32.totalorder %s39, %s42
      %p51 = scmp.eq.s32.totalorder %s34, 1
      %p52 = por %p50, %p51
      %p53 = scmp.ne.s32.totalorder %s42, %s43
      %p54 = scmp.eq.s32.totalorder %s34, 0
      %p55 = por %p53, %p54
      %p56 = scmp.ne.s32.totalorder %s42, %s43
      %p57 = scmp.eq.s32.totalorder %s35, 1
      %p58 = por %p56, %p57
      %p60 = scmp.ne.s32.totalorder %s43, %s59
      %p61 = scmp.eq.s32.totalorder %s35, 0
      %p62 = por %p60, %p61
      %s63 = ssub.s32 %s29, %s36
      %p64 = scmp.eq.s32.totalorder %s63, 0
      %s66 = sadd.s32 %s65, 1
      %s67 = scalar_select %p64, %s65, %s66
      %p70 = pneg %p64
      %p71 = scmp.eq.s32.totalorder %s29, 1
      %p72 = por %p70, %p71
      %p73 = scmp.ne.s32.totalorder %s65, %s68
      %p74 = scmp.eq.s32.totalorder %s29, 0
      %p75 = por %p73, %p74
      %p76 = scmp.ne.s32.totalorder %s65, %s68
      %p77 = scmp.eq.s32.totalorder %s34, 1
      %p78 = por %p76, %p77
      %p79 = scmp.ne.s32.totalorder %s68, %s69
      %p80 = scmp.eq.s32.totalorder %s34, 0
      %p81 = por %p79, %p80
      %p82 = scmp.ne.s32.totalorder %s68, %s69
      %p83 = scmp.eq.s32.totalorder %s35, 1
      %p84 = por %p82, %p83
      %p86 = scmp.ne.s32.totalorder %s69, %s85
      %p87 = scmp.eq.s32.totalorder %s35, 0
      %p88 = por %p86, %p87
      %s90 = sadd.s32 %s89, 1
      %p93 = scmp.eq.s32.totalorder %s29, 1
      %p94 = scmp.ne.s32.totalorder %s89, %s91
      %p95 = scmp.eq.s32.totalorder %s29, 0
      %p96 = por %p94, %p95
      %p97 = scmp.ne.s32.totalorder %s89, %s91
      %p98 = scmp.eq.s32.totalorder %s34, 1
      %p99 = por %p97, %p98
      %p100 = scmp.ne.s32.totalorder %s91, %s92
      %p101 = scmp.eq.s32.totalorder %s34, 0
      %p102 = por %p100, %p101
      %p103 = scmp.ne.s32.totalorder %s91, %s92
      %p104 = scmp.eq.s32.totalorder %s35, 1
      %p105 = por %p103, %p104
      %p107 = scmp.ne.s32.totalorder %s92, %s106
      %p108 = scmp.eq.s32.totalorder %s35, 0
      %p109 = por %p107, %p108
      %s111 = sadd.s32 %s110, 1
      %p114 = scmp.eq.s32.totalorder %s29, 1
      %p115 = scmp.ne.s32.totalorder %s110, %s112
      %p116 = scmp.eq.s32.totalorder %s29, 0
      %p117 = por %p115, %p116
      %p118 = scmp.ne.s32.totalorder %s110, %s112
      %p119 = scmp.eq.s32.totalorder %s34, 1
      %p120 = por %p118, %p119
      %p121 = scmp.ne.s32.totalorder %s112, %s113
      %p122 = scmp.eq.s32.totalorder %s34, 0
      %p123 = por %p121, %p122
      %p124 = scmp.ne.s32.totalorder %s112, %s113
      %p125 = scmp.eq.s32.totalorder %s35, 1
      %p126 = por %p124, %p125
      %p128 = scmp.ne.s32.totalorder %s113, %s127
      %p129 = scmp.eq.s32.totalorder %s35, 0
      %p130 = por %p128, %p129
      %s132 = sadd.s32 %s131, 1
      %p135 = scmp.eq.s32.totalorder %s29, 1
      %p136 = scmp.ne.s32.totalorder %s131, %s133
      %p137 = scmp.eq.s32.totalorder %s29, 0
      %p138 = por %p136, %p137
      %p139 = scmp.ne.s32.totalorder %s131, %s133
      %p140 = scmp.eq.s32.totalorder %s34, 1
      %p141 = por %p139, %p140
      %p142 = scmp.ne.s32.totalorder %s133, %s134
      %p143 = scmp.eq.s32.totalorder %s34, 0
      %p144 = por %p142, %p143
      %p145 = scmp.ne.s32.totalorder %s133, %s134
      %p146 = scmp.eq.s32.totalorder %s35, 1
      %p147 = por %p145, %p146
      %p149 = scmp.ne.s32.totalorder %s134, %s148
      %p150 = scmp.eq.s32.totalorder %s35, 0
      %p151 = por %p149, %p150
      %s153 = sadd.s32 %s152, 1
      %p156 = scmp.eq.s32.totalorder %s29, 1
      %p157 = scmp.ne.s32.totalorder %s152, %s154
      %p158 = scmp.eq.s32.totalorder %s29, 0
      %p159 = por %p157, %p158
      %p160 = scmp.ne.s32.totalorder %s152, %s154
      %p161 = scmp.eq.s32.totalorder %s34, 1
      %p162 = por %p160, %p161
      %p163 = scmp.ne.s32.totalorder %s154, %s155
      %p164 = scmp.eq.s32.totalorder %s34, 0
      %p165 = por %p163, %p164
      %p166 = scmp.ne.s32.totalorder %s154, %s155
      %p167 = scmp.eq.s32.totalorder %s35, 1
      %p168 = por %p166, %p167
      %p170 = scmp.ne.s32.totalorder %s155, %s169
      %p171 = scmp.eq.s32.totalorder %s35, 0
      %p172 = por %p170, %p171
      %s174 = sadd.s32 %s173, 1
      %p177 = scmp.eq.s32.totalorder %s29, 1
      %p178 = scmp.ne.s32.totalorder %s173, %s175
      %p179 = scmp.eq.s32.totalorder %s29, 0
      %p180 = por %p178, %p179
      %p181 = scmp.ne.s32.totalorder %s173, %s175
      %p182 = scmp.eq.s32.totalorder %s34, 1
      %p183 = por %p181, %p182
      %p184 = scmp.ne.s32.totalorder %s175, %s176
      %p185 = scmp.eq.s32.totalorder %s34, 0
      %p186 = por %p184, %p185
      %p187 = scmp.ne.s32.totalorder %s175, %s176
      %p188 = scmp.eq.s32.totalorder %s35, 1
      %p189 = por %p187, %p188
      %p191 = scmp.ne.s32.totalorder %s176, %s190
      %p192 = scmp.eq.s32.totalorder %s35, 0
      %p193 = por %p191, %p192
      %s194 = ssub.s32 %s29, %s36
      %p195 = scmp.eq.s32.totalorder %s194, 0
      %s197 = sadd.s32 %s196, 1
      %s198 = scalar_select %p195, %s196, %s197
      %p201 = pneg %p195
      %p202 = scmp.eq.s32.totalorder %s29, 1
      %p203 = por %p201, %p202
      %p204 = scmp.ne.s32.totalorder %s196, %s199
      %p205 = scmp.eq.s32.totalorder %s29, 0
      %p206 = por %p204, %p205
      %p207 = scmp.ne.s32.totalorder %s196, %s199
      %p208 = scmp.eq.s32.totalorder %s34, 1
      %p209 = por %p207, %p208
      %p210 = scmp.ne.s32.totalorder %s199, %s200
      %p211 = scmp.eq.s32.totalorder %s34, 0
      %p212 = por %p210, %p211
      %p213 = scmp.ne.s32.totalorder %s199, %s200
      %p214 = scmp.eq.s32.totalorder %s35, 1
      %p215 = por %p213, %p214
      %p217 = scmp.ne.s32.totalorder %s200, %s216
      %p218 = scmp.eq.s32.totalorder %s35, 0
      %p219 = por %p217, %p218
      %p220 = scmp.le.s32.totalorder 1, %s29
      %p221 = scmp.lt.s32.totalorder %s29, 3
      %p222 = pnand %p220, %p221
      %p223 = pneg %p222
      // Predicated region
      $region9: #{tpu_custom_call.1} parent=5 // pred_check
        _
      $region10: #{tpu_custom_call.1} parent=5 // pred_check_branch
        %225 = sbr.rel (%p222) target = $region12
      $region11: #{tpu_custom_call.1} parent=5 // pred_region
        %s226 = ssub.s32 %s29, 1
        // Predicated region
        $region13: #{tpu_custom_call.1} parent=11 // pred_check
          %p227 = pneg %p102
        $region14: #{tpu_custom_call.1} parent=11 // pred_check_branch
          %229 = sbr.rel (%p227) target = $region16
        $region15: #{tpu_custom_call.1} parent=11 // pred_region
          %s231 = ssub.s32 32, 32
          %232 = vsyncadd [#allocation8], %s231
          %s234 = sshll.u32 [#allocation9], 4
          %s235 = int_to_ptr.vmem [resolvable:$true] %s234
          %237 = dma.hbm_to_vmem [thread:$0]  %s3, 32, %s235, [#allocation8]
        $region16: #{tpu_custom_call.1} parent=11 // pred_fallthru
          _
        // Predicated region
        $region17: #{tpu_custom_call.1} parent=11 // pred_check
          %p238 = pneg %p123
        $region18: #{tpu_custom_call.1} parent=11 // pred_check_branch
          %240 = sbr.rel (%p238) target = $region20
        $region19: #{tpu_custom_call.1} parent=11 // pred_region
          %s242 = ssub.s32 4608, 4608
          %243 = vsyncadd [#allocation11], %s242
          %s244 = sshll.u32 [#allocation10], 4
          %s245 = int_to_ptr.vmem [resolvable:$true] %s244
          %250 = dma.hbm_to_vmem [thread:$0]  %s4, 4608, %s245, [#allocation11], 128, 128, 8
        $region20: #{tpu_custom_call.1} parent=11 // pred_fallthru
          _
        // Predicated region
        $region21: #{tpu_custom_call.1} parent=11 // pred_check
          %p251 = pneg %p144
        $region22: #{tpu_custom_call.1} parent=11 // pred_check_branch
          %253 = sbr.rel (%p251) target = $region24
        $region23: #{tpu_custom_call.1} parent=11 // pred_region
          %s255 = ssub.s32 512, 512
          %256 = vsyncadd [#allocation11], %s255
          %s257 = sshll.u32 [#allocation12], 4
          %s258 = int_to_ptr.vmem [resolvable:$true] %s257
          %263 = dma.hbm_to_vmem [thread:$0]  %s5, 512, %s258, [#allocation11], 128, 128, 8
        $region24: #{tpu_custom_call.1} parent=11 // pred_fallthru
          _
        // Predicated region
        $region25: #{tpu_custom_call.1} parent=11 // pred_check
          %p264 = pneg %p165
        $region26: #{tpu_custom_call.1} parent=11 // pred_check_branch
          %266 = sbr.rel (%p264) target = $region28
        $region27: #{tpu_custom_call.1} parent=11 // pred_region
          %s268 = ssub.s32 128, 128
          %269 = vsyncadd [#allocation14], %s268
          %s271 = sshll.u32 [#allocation13], 4
          %s272 = int_to_ptr.vmem [resolvable:$true] %s271
          %274 = dma.hbm_to_vmem [thread:$0]  %s6, 128, %s272, [#allocation14]
        $region28: #{tpu_custom_call.1} parent=11 // pred_fallthru
          _
        // Predicated region
        $region29: #{tpu_custom_call.1} parent=11 // pred_check
          %p275 = pneg %p186
        $region30: #{tpu_custom_call.1} parent=11 // pred_check_branch
          %277 = sbr.rel (%p275) target = $region32
        $region31: #{tpu_custom_call.1} parent=11 // pred_region
          %s279 = ssub.s32 128, 128
          %280 = vsyncadd [#allocation14], %s279
          %s282 = sshll.u32 [#allocation15], 4
          %s283 = int_to_ptr.vmem [resolvable:$true] %s282
          %285 = dma.hbm_to_vmem [thread:$0]  %s7, 128, %s283, [#allocation14]
        $region32: #{tpu_custom_call.1} parent=11 // pred_fallthru
          _
      $region12: #{tpu_custom_call.1} parent=5 // pred_fallthru
        _
      %p286 = scmp.lt.s32.totalorder %s29, 2
      // Predicated region
      $region33: #{tpu_custom_call.1} parent=5 // pred_check
        %p287 = pneg %p286
      $region34: #{tpu_custom_call.1} parent=5 // pred_check_branch
        %289 = sbr.rel (%p287) target = $region36
      $region35: #{tpu_custom_call.1} parent=5 // pred_region
        // Predicated region
        $region37: #{tpu_custom_call.1} parent=35 // pred_check
          %p290 = pneg %p49
        $region38: #{tpu_custom_call.1} parent=35 // pred_check_branch
          %292 = sbr.rel (%p290) target = $region40
        $region39: #{tpu_custom_call.1} parent=35 // pred_region
          %s293 = sand.u32 %s39, 1
          %s294 = scalar_lea.sflag [#allocation5], %s293
          %s295 = sand.u32 %s39, 1
          %s296 = smul.addr %s295, 16
          %s297 = scalar_lea.vmem [#allocation4], %s296
          %s299 = ssub.s32 256, 256
          %300 = vsyncadd %s294, %s299
          %s301 = smul.addr %s29, 2
          %s302 = smul.addr %s301, 128
          %s303 = scalar_lea.hbm %s1, %s302
          %s305 = sshll.u32 %s297, 4
          %s306 = int_to_ptr.vmem [resolvable:$true] %s305
          %308 = dma.hbm_to_vmem [thread:$0]  %s303, 256, %s306, %s294
        $region40: #{tpu_custom_call.1} parent=35 // pred_fallthru
          _
        // Predicated region
        $region41: #{tpu_custom_call.1} parent=35 // pred_check
          %p309 = pneg %p75
        $region42: #{tpu_custom_call.1} parent=35 // pred_check_branch
          %311 = sbr.rel (%p309) target = $region44
        $region43: #{tpu_custom_call.1} parent=35 // pred_region
          %s312 = sand.u32 %s29, 1
          %s313 = scalar_lea.sflag [#allocation8], %s312
          %s314 = sand.u32 %s65, 1
          %s315 = smul.addr %s314, 8
          %s316 = scalar_lea.vmem [#allocation7], %s315
          %s318 = ssub.s32 128, 128
          %319 = vsyncadd %s313, %s318
          %s320 = smul.addr %s29, 2
          %s321 = smul.addr %s320, 64
          %s322 = scalar_lea.hbm %s2, %s321
          %s324 = sshll.u32 %s316, 4
          %s325 = int_to_ptr.vmem [resolvable:$true] %s324
          %327 = dma.hbm_to_vmem [thread:$0]  %s322, 128, %s325, %s313
        $region44: #{tpu_custom_call.1} parent=35 // pred_fallthru
          _
      $region36: #{tpu_custom_call.1} parent=5 // pred_fallthru
        _
      %p328 = scmp.le.s32.totalorder 1, %s29
      %p329 = scmp.lt.s32.totalorder %s29, 3
      %p330 = pnand %p328, %p329
      %p331 = pneg %p330
      // Predicated region
      $region45: #{tpu_custom_call.1} parent=5 // pred_check
        _
      $region46: #{tpu_custom_call.1} parent=5 // pred_check_branch
        %333 = sbr.rel (%p330) target = $region48
      $region47: #{tpu_custom_call.1} parent=5 // pred_region
        %s334 = ssub.s32 %s29, 1
        %s335 = sand.u32 %s42, 1
        %s336 = scalar_lea.sflag [#allocation5], %s335
        %s337 = sand.u32 %s42, 1
        %s338 = smul.addr %s337, 16
        %s339 = scalar_lea.vmem [#allocation4], %s338
        // Predicated region
        $region49: #{tpu_custom_call.1} parent=47 // pred_check
          %p340 = pneg %p55
        $region50: #{tpu_custom_call.1} parent=47 // pred_check_branch
          %342 = sbr.rel (%p340) target = $region52
        $region51: #{tpu_custom_call.1} parent=47 // pred_region
          %343 = dma.done %s336, 256
        $region52: #{tpu_custom_call.1} parent=47 // pred_fallthru
          _
        %s344 = sand.u32 %s34, 1
        %s345 = scalar_lea.sflag [#allocation8], %s344
        %s346 = sand.u32 %s68, 1
        %s347 = smul.addr %s346, 8
        %s348 = scalar_lea.vmem [#allocation7], %s347
        // Predicated region
        $region53: #{tpu_custom_call.1} parent=47 // pred_check
          %p349 = pneg %p81
        $region54: #{tpu_custom_call.1} parent=47 // pred_check_branch
          %351 = sbr.rel (%p349) target = $region56
        $region55: #{tpu_custom_call.1} parent=47 // pred_region
          %352 = dma.done %s345, 128
        $region56: #{tpu_custom_call.1} parent=47 // pred_fallthru
          _
        // Predicated region
        $region57: #{tpu_custom_call.1} parent=47 // pred_check
          %p353 = pneg %p102
        $region58: #{tpu_custom_call.1} parent=47 // pred_check_branch
          %355 = sbr.rel (%p353) target = $region60
        $region59: #{tpu_custom_call.1} parent=47 // pred_region
          %356 = dma.done [#allocation8], 32
        $region60: #{tpu_custom_call.1} parent=47 // pred_fallthru
          _
        // Predicated region
        $region61: #{tpu_custom_call.1} parent=47 // pred_check
          %p357 = pneg %p123
        $region62: #{tpu_custom_call.1} parent=47 // pred_check_branch
          %359 = sbr.rel (%p357) target = $region64
        $region63: #{tpu_custom_call.1} parent=47 // pred_region
          %360 = dma.done [#allocation11], 4608
        $region64: #{tpu_custom_call.1} parent=47 // pred_fallthru
          _
        // Predicated region
        $region65: #{tpu_custom_call.1} parent=47 // pred_check
          %p361 = pneg %p144
        $region66: #{tpu_custom_call.1} parent=47 // pred_check_branch
          %363 = sbr.rel (%p361) target = $region68
        $region67: #{tpu_custom_call.1} parent=47 // pred_region
          %364 = dma.done [#allocation11], 512
        $region68: #{tpu_custom_call.1} parent=47 // pred_fallthru
          _
        // Predicated region
        $region69: #{tpu_custom_call.1} parent=47 // pred_check
          %p365 = pneg %p165
        $region70: #{tpu_custom_call.1} parent=47 // pred_check_branch
          %367 = sbr.rel (%p365) target = $region72
        $region71: #{tpu_custom_call.1} parent=47 // pred_region
          %368 = dma.done [#allocation14], 128
        $region72: #{tpu_custom_call.1} parent=47 // pred_fallthru
          _
        // Predicated region
        $region73: #{tpu_custom_call.1} parent=47 // pred_check
          %p369 = pneg %p186
        $region74: #{tpu_custom_call.1} parent=47 // pred_check_branch
          %371 = sbr.rel (%p369) target = $region76
        $region75: #{tpu_custom_call.1} parent=47 // pred_region
          %372 = dma.done [#allocation14], 128
        $region76: #{tpu_custom_call.1} parent=47 // pred_fallthru
          _
        %s373 = sand.u32 %s42, 1
        %s374 = scalar_lea.sflag [#allocation5], %s373
        %s375 = sand.u32 %s42, 1
        %s376 = smul.addr %s375, 16
        %s377 = scalar_lea.vmem [#allocation4], %s376
        %p378 = pneg %p55
        %p379 = pneg %p52
        %s380 = sand.u32 %s34, 1
        %s381 = scalar_lea.sflag [#allocation8], %s380
        %s382 = sand.u32 %s68, 1
        %s383 = smul.addr %s382, 8
        %s384 = scalar_lea.vmem [#allocation7], %s383
        %p385 = pneg %p81
        %p386 = pneg %p78
        %p387 = pneg %p102
        %p388 = pneg %p99
        %p389 = pneg %p123
        %p390 = pneg %p120
        %p391 = pneg %p144
        %p392 = pneg %p141
        %p393 = pneg %p165
        %p394 = pneg %p162
        %p395 = pneg %p186
        %p396 = pneg %p183
        %p397 = pneg %p212
        %p398 = pneg %p209
        %s399 = sand.u32 %s199, 1
        %s400 = scalar_lea.sflag [#allocation6], %s399
        %s401 = sand.u32 %s199, 1
        %s402 = smul.addr %s401, 8
        %s403 = scalar_lea.vmem [#allocation16], %s402
        %v404 = vld [vmem:[%s339] sm:$0x3f]
        %v405 = vld [vmem:[%s339 + $0x8] sm:$0x3f]
        %v406 = vld [vmem:[%s348] sm:$0x77]
        %v407 = vld [vmem:[#allocation9] sm:$0x3]
        %v408 = vlaneseq
        %v409 = vand.u32 %v408, 127
        %v410 = vadd.s32 %v409, 128
        %vm411 = vcmp.ge.s32.totalorder %v409, 16
        %vm412 = vcmp.ge.s32.totalorder %v410, 16
        %vm413 = vcmp.lt.s32.totalorder %v409, 240
        %vm414 = vcmp.lt.s32.totalorder %v410, 240
        %vm415 = vcmp.ge.s32.totalorder %v407, 1
        %vm416 = vcmp.lt.s32.totalorder %v407, 15
        %417 = vrot.lane.b32.xlu0 %v404, 112
        %v418 = vpop.permute.xlu0 %417
        %419 = vrot.lane.b32.xlu0 %v405, 112
        %v420 = vpop.permute.xlu0 %419
        %vm421 = vcmp.lt.s32.totalorder %v409, 112
        %v422 = vsel %vm421, %v418, %v420
        %v423 = vsel %vm421, %v420, %v418
        %424 = vrot.lane.b32.xlu0 %v404, 127
        %v425 = vpop.permute.xlu0 %424
        %426 = vrot.lane.b32.xlu0 %v405, 127
        %v427 = vpop.permute.xlu0 %426
        %vm428 = vcmp.lt.s32.totalorder %v409, 127
        %v429 = vsel %vm428, %v425, %v427
        %v430 = vsel %vm428, %v427, %v425
        %v431 = vsub.f32 %v422, %v404
        %v432 = vsub.f32 %v423, %v405
        %v433 = vsel %vm413, 1, 0
        %v434 = vsel %vm414, 1, 0
        %vm435 = vcmp.eq.s32.totalorder %v433, 1
        %vm436 = vcmp.eq.s32.totalorder %v434, 1
        %v437 = vsel %vm435, %v431, 0.0
        %v438 = vsel %vm436, %v432, 0.0
        %v439 = vsub.f32 %v429, %v404
        %v440 = vsub.f32 %v430, %v405
        %v441 = vsel %vm416, 1, 0
        %v442 = vlaneseq
        %v443 = vshrl.u32 %v442, 7
        %v444 = vsub.s32 0, %v443
        %v445 = vrot.slane %v441, %v444
        %v446 = vlaneseq
        %v447 = vshrl.u32 %v446, 7
        %v448 = vsub.s32 1, %v447
        %v449 = vrot.slane %v441, %v448
        %vm450 = vcmp.eq.s32.totalorder %v445, 1
        %vm451 = vcmp.eq.s32.totalorder %v449, 1
        %v452 = vsel %vm450, %v439, 0.0
        %v453 = vsel %vm451, %v440, 0.0
        %v454 = vand.u32 2147483647, %v437
        %v455 = vand.u32 2147483647, %v438
        %vm456 = vcmask 1042432
        %v457 = vsel %vm456, %v454, 0.0
        %v458 = vrot.slane %v457, 4
        %v459 = vadd.f32 %v457, %v458
        %v460 = vrot.slane %v459, 2
        %v461 = vadd.f32 %v459, %v460
        %v462 = vrot.slane %v461, 1
        %v463 = vadd.f32 %v461, %v462
        %v464 = vsel %vm456, %v455, 0.0
        %v465 = vrot.slane %v464, 4
        %v466 = vadd.f32 %v464, %v465
        %v467 = vrot.slane %v466, 2
        %v468 = vadd.f32 %v466, %v467
        %v469 = vrot.slane %v468, 1
        %v470 = vadd.f32 %v468, %v469
        %v471 = vmax.f32 %v463, 1e-12
        %v472 = vmax.f32 %v470, 1e-12
        %v473 = vrcp.pop %v471
        %v474 = vmul.f32 %v437, %v473
        %v475 = vrcp.pop %v472
        %v476 = vmul.f32 %v438, %v475
        %v477 = vmul.f32 %v474, 0.1
        %v478 = vmul.f32 %v476, 0.1
        %v479 = vsub.f32 %v437, %v477
        %v480 = vsub.f32 %v438, %v478
        %v481 = vand.u32 2147483647, %v452
        %v482 = vand.u32 2147483647, %v453
        %v483 = vsel %vm456, %v481, 0.0
        %v484 = vrot.slane %v483, 4
        %v485 = vadd.f32 %v483, %v484
        %v486 = vrot.slane %v485, 2
        %v487 = vadd.f32 %v485, %v486
        %v488 = vrot.slane %v487, 1
        %v489 = vadd.f32 %v487, %v488
        %v490 = vsel %vm456, %v482, 0.0
        %v491 = vrot.slane %v490, 4
        %v492 = vadd.f32 %v490, %v491
        %v493 = vrot.slane %v492, 2
        %v494 = vadd.f32 %v492, %v493
        %v495 = vrot.slane %v494, 1
        %v496 = vadd.f32 %v494, %v495
        %v497 = vmax.f32 %v489, 1e-12
        %v498 = vmax.f32 %v496, 1e-12
        %v499 = vrcp.pop %v497
        %v500 = vmul.f32 %v452, %v499
        %v501 = vrcp.pop %v498
        %v502 = vmul.f32 %v453, %v501
        %v503 = vmul.f32 %v500, 0.1
        %v504 = vmul.f32 %v502, 0.1
        %v505 = vsub.f32 %v452, %v503
        %v506 = vsub.f32 %v453, %v504
        %v507 = vand.u32 2147483647, %v406
        %v509 = vcombine.high %v507, %v507
        %v511 = vsel %vm456, %v507, 0.0
        %v512 = vrot.slane %v511, 4
        %v513 = vadd.f32 %v511, %v512
        %v514 = vrot.slane %v513, 2
        %v515 = vadd.f32 %v513, %v514
        %v516 = vrot.slane %v515, 1
        %v517 = vadd.f32 %v515, %v516
        %v518 = vsel %vm456, %v509, 0.0
        %v519 = vrot.slane %v518, 4
        %v520 = vadd.f32 %v518, %v519
        %v521 = vrot.slane %v520, 2
        %v522 = vadd.f32 %v520, %v521
        %v523 = vrot.slane %v522, 1
        %v524 = vadd.f32 %v522, %v523
        %v525 = vmax.f32 %v517, 1e-12
        %v526 = vmax.f32 %v524, 1e-12
        %v529 = vcombine.low %v525, %v526
        %v531 = vrcp.pop %v529
        %v532 = vmul.f32 %v406, %v531
        %s533 = smul.u32 %s34, 128
        %s534 = sld [smem:[#allocation3 + %s533]]
        %s535 = sadd.s32 %s533, 1
        %s536 = sld [smem:[#allocation3 + %s535]]
        %s537 = sadd.s32 %s533, 2
        %s538 = sld [smem:[#allocation3 + %s537]]
        %v539 = vstv %s534
        %v540 = vstv %s536
        %v541 = vstv %s538
        %v544 = vrot.slane %v437, 5
        %v545 = vrot.slane %v438, 5
        %v550 = vrot.slane %v505, 7
        %v551 = vrot.slane %v506, 7
        %v556 = vrot.slane %v452, 4
        %v557 = vrot.slane %v453, 4
        %v561 = vcombine.high %v406, %v406
        %v562 = vrot.slane %v406, 3
        %v563 = vrot.slane %v561, 3
        %v567 = vcombine.high %v532, %v532
        %v569 = vsel %vm456, %v479, %v544
        %v570 = vsel %vm456, %v480, %v545
        %vm571 = vcmask 1040384
        %v572 = vsel %vm571, %v544, %v550
        %v573 = vsel %vm571, %v545, %v551
        %vm574 = vcmask 1043456
        %v575 = vsel %vm574, %v572, %v556
        %v576 = vsel %vm574, %v573, %v557
        %vm577 = vcmask 1041408
        %v578 = vsel %vm577, %v556, %v539
        %v579 = vsel %vm577, %v557, %v539
        %v580 = vsel %vm456, %v578, %v540
        %v581 = vsel %vm456, %v579, %v540
        %v582 = vsel %vm574, %v580, %v541
        %v583 = vsel %vm574, %v581, %v541
        %vm584 = vcmask 1044480
        %v585 = vsel %vm584, %v582, %v562
        %v586 = vsel %vm584, %v583, %v563
        %587 = vrot.lane.b32.xlu0 %v569, 17
        %v588 = vpop.permute.xlu0 %587
        %589 = vrot.lane.b32.xlu0 %v575, 17
        %v590 = vpop.permute.xlu0 %589
        %591 = vrot.lane.b32.xlu0 %v585, 17
        %v592 = vpop.permute.xlu0 %591
        %593 = vrot.lane.b32.xlu0 %v532, 17
        %v594 = vpop.permute.xlu0 %593
        %595 = vrot.lane.b32.xlu0 %v570, 17
        %v596 = vpop.permute.xlu0 %595
        %597 = vrot.lane.b32.xlu0 %v576, 17
        %v598 = vpop.permute.xlu0 %597
        %599 = vrot.lane.b32.xlu0 %v586, 17
        %v600 = vpop.permute.xlu0 %599
        %601 = vrot.lane.b32.xlu0 %v567, 17
        %v602 = vpop.permute.xlu0 %601
        %vm603 = vcmp.lt.s32.totalorder %v409, 17
        %v604 = vsel %vm603, %v588, %v596
        %v605 = vsel %vm603, %v590, %v598
        %v606 = vsel %vm603, %v592, %v600
        %v607 = vsel %vm603, %v594, %v602
        %v608 = vsel %vm603, %v596, %v588
        %v609 = vsel %vm603, %v598, %v590
        %v610 = vsel %vm603, %v600, %v592
        %v611 = vsel %vm603, %v602, %v594
        %v612 = vsel %vm415, 1, 0
        %v613 = vlaneseq
        %v614 = vshrl.u32 %v613, 7
        %v615 = vsub.s32 0, %v614
        %v616 = vrot.slane %v612, %v615
        %v617 = vlaneseq
        %v618 = vshrl.u32 %v617, 7
        %v619 = vsub.s32 1, %v618
        %v620 = vrot.slane %v612, %v619
        %vm621 = vcmp.ne.s32.totalorder %v616, 0
        %vm622 = vcmp.ne.s32.totalorder %v620, 0
        %vm623 = vmand %vm411, %vm621
        %vm624 = vmand %vm412, %vm622
        %v625 = vsel %vm623, 1, 0
        %v626 = vsel %vm624, 1, 0
        %v627 = vlaneseq
        %v628 = vshrl.u32 %v627, 7
        %v629 = vsub.s32 0, %v628
        %v630 = vrot.slane %v625, %v629
        %v631 = vlaneseq
        %v632 = vshrl.u32 %v631, 7
        %v633 = vsub.s32 0, %v632
        %v634 = vrot.slane %v626, %v633
        %vm635 = vcmp.eq.s32.totalorder %v630, 1
        %vm636 = vcmp.eq.s32.totalorder %v634, 1
        %v637 = vsel %vm635, %v608, 0.0
        %v638 = vsel %vm636, %v604, 0.0
        %v639 = vsel %vm635, %v609, 0.0
        %v640 = vsel %vm636, %v605, 0.0
        %v641 = vsel %vm635, %v610, 0.0
        %v642 = vsel %vm636, %v606, 0.0
        %v643 = vsel %vm635, %v611, 0.0
        %v644 = vsel %vm636, %v607, 0.0
        %v645 = vld [vmem:[#allocation10] sm:$0xff]
        %v646 = vld [vmem:[#allocation10 + $0x8] sm:$0xff]
        %v647 = vld [vmem:[#allocation10 + $0x10] sm:$0xff]
        %v648 = vld [vmem:[#allocation10 + $0x18] sm:$0xff]
        %649 = vrot.lane.b32.xlu0 %v569, 16
        %v650 = vpop.permute.xlu0 %649
        %651 = vrot.lane.b32.xlu0 %v575, 16
        %v652 = vpop.permute.xlu0 %651
        %653 = vrot.lane.b32.xlu0 %v585, 16
        %v654 = vpop.permute.xlu0 %653
        %655 = vrot.lane.b32.xlu0 %v532, 16
        %v656 = vpop.permute.xlu0 %655
        %657 = vrot.lane.b32.xlu0 %v570, 16
        %v658 = vpop.permute.xlu0 %657
        %659 = vrot.lane.b32.xlu0 %v576, 16
        %v660 = vpop.permute.xlu0 %659
        %661 = vrot.lane.b32.xlu0 %v586, 16
        %v662 = vpop.permute.xlu0 %661
        %663 = vrot.lane.b32.xlu0 %v567, 16
        %v664 = vpop.permute.xlu0 %663
        %vm665 = vcmp.lt.s32.totalorder %v409, 16
        %v666 = vsel %vm665, %v650, %v658
        %v667 = vsel %vm665, %v652, %v660
        %v668 = vsel %vm665, %v654, %v662
        %v669 = vsel %vm665, %v656, %v664
        %v670 = vsel %vm665, %v658, %v650
        %v671 = vsel %vm665, %v660, %v652
        %v672 = vsel %vm665, %v662, %v654
        %v673 = vsel %vm665, %v664, %v656
        %v674 = vsel %vm411, 1, 0
        %v675 = vsel %vm412, 1, 0
        %vm676 = vcmp.eq.s32.totalorder %v674, 1
        %vm677 = vcmp.eq.s32.totalorder %v675, 1
        %v678 = vsel %vm676, %v670, 0.0
        %v679 = vsel %vm677, %v666, 0.0
        %v680 = vsel %vm676, %v671, 0.0
        %v681 = vsel %vm677, %v667, 0.0
        %v682 = vsel %vm676, %v672, 0.0
        %v683 = vsel %vm677, %v668, 0.0
        %v684 = vsel %vm676, %v673, 0.0
        %v685 = vsel %vm677, %v669, 0.0
        %s686 = scalar_lea.vmem [#allocation10], 32
        %v687 = vld [vmem:[%s686] sm:$0xff]
        %v688 = vld [vmem:[%s686 + $0x8] sm:$0xff]
        %v689 = vld [vmem:[%s686 + $0x10] sm:$0xff]
        %v690 = vld [vmem:[%s686 + $0x18] sm:$0xff]
        %vm691 = vcmask 220160
        %v693 = vsel %vm691, %v687, 0
        %v696 = vsel %vm691, %v688, 0
        %v699 = vsel %vm691, %v689, 0
        %v702 = vsel %vm691, %v690, 0
        %v705 = vsel %vm456, %v684, 0
        %v708 = vsel %vm456, %v685, 0
        %710 = vmatprep.subr.mxu0 %v679
        %711 = vmatpush1.msra.mxu0 %v678
        %712 = vmatprep.subr.mxu0 %v681
        %713 = vmatpush1.msra.mxu0 %v680
        %714 = vmatprep.subr.mxu0 %v683
        %715 = vmatpush1.msra.mxu0 %v682
        %716 = vmatprep.subr.mxu0 %v708
        %717 = vmatpush1.msra.mxu0 %v705
        %718 = vmatprep.subr.mxu0 0.0
        %719 = vmatpush1.msra.mxu0 0.0
        %720 = vmatprep.subr.mxu0 0.0
        %721 = vmatpush1.msra.mxu0 0.0
        %722 = vmatprep.subr.mxu0 0.0
        %723 = vmatpush1.msra.mxu0 0.0
        %724 = vmatprep.subr.mxu0 0.0
        %725 = vmatpush1.msra.mxu0 0.0
        %726 = vmatprep.subr.mxu0 0.0
        %727 = vmatpush1.msra.mxu0 0.0
        %728 = vmatprep.subr.mxu0 0.0
        %729 = vmatpush1.msra.mxu0 0.0
        %730 = vmatprep.subr.mxu0 0.0
        %731 = vmatpush1.msra.mxu0 0.0
        %732 = vmatprep.subr.mxu0 0.0
        %733 = vmatpush1.msra.mxu0 0.0
        %734 = vmatprep.subr.mxu0 0.0
        %735 = vmatpush1.msra.mxu0 0.0
        %736 = vmatprep.subr.mxu0 0.0
        %737 = vmatpush1.msra.mxu0 0.0
        %738 = vmatprep.subr.mxu0 0.0
        %739 = vmatpush1.msra.mxu0 0.0
        %740 = vmatprep.subr.mxu0 0.0
        %741 = vmatpush1.msra.mxu0 0.0
        %742 = vmatprep.subr.mxu0 0.0
        %743 = vmatpush1.msra.mxu0 0.0
        %744 = vmatprep.subr.mxu0 0.0
        %745 = vmatpush1.msra.mxu0 0.0
        %746 = vmatprep.subr.mxu0 0.0
        %747 = vmatpush1.msra.mxu0 0.0
        %748 = vmatprep.subr.mxu0 0.0
        %749 = vmatpush1.msra.mxu0 0.0
        %750 = vmatprep.subr.mxu0 0.0
        %751 = vmatpush1.msra.mxu0 0.0
        %752 = vmatprep.subr.mxu0 0.0
        %753 = vmatpush1.msra.mxu0 0.0
        %754 = vmatprep.subr.mxu0 0.0
        %755 = vmatpush1.msra.mxu0 0.0
        %756 = vmatprep.subr.mxu0 0.0
        %757 = vmatpush1.msra.mxu0 0.0
        %758 = vmatprep.subr.mxu0 0.0
        %759 = vmatpush1.msra.mxu0 0.0
        %760 = vmatprep.subr.mxu0 0.0
        %761 = vmatpush1.msra.mxu0 0.0
        %762 = vmatprep.subr.mxu0 0.0
        %763 = vmatpush1.msra.mxu0 0.0
        %764 = vmatprep.subr.mxu0 0.0
        %765 = vmatpush1.msra.mxu0 0.0
        %766 = vmatprep.subr.mxu0 0.0
        %767 = vmatpush1.msra.mxu0 0.0
        %768 = vmatprep.subr.mxu0 0.0
        %769 = vmatpush1.msra.mxu0 0.0
        %770 = vmatprep.subr.mxu0 0.0
        %771 = vmatpush1.msra.mxu0 0.0
        %772 = vmatprep.subr.mxu0 0.0
        %773 = vmatpush1.msra.mxu0 0.0
        %774 = vmatprep.mubr.f32.mxu0 0.0
        %775 = vmatmul.mubr.f32.gmra.mrb[0].mxu0 %v693
        %v776 = vpop.f32.mrb[0].mxu0
        %v777 = vadd.f32 0.0, %v776
        %v778 = vpop.f32.mrb[0].mxu0
        %v779 = vadd.f32 0.0, %v778
        %780 = vmatprep.mubr.f32.mxu0 0.0
        %781 = vmatmul.mubr.f32.gmra.mrb[0].mxu0 %v696
        %v782 = vpop.f32.mrb[0].mxu0
        %v783 = vadd.f32 0.0, %v782
        %v784 = vpop.f32.mrb[0].mxu0
        %v785 = vadd.f32 0.0, %v784
        %786 = vmatprep.mubr.f32.mxu0 0.0
        %787 = vmatmul.mubr.f32.gmra.mrb[0].mxu0 %v699
        %v788 = vpop.f32.mrb[0].mxu0
        %v789 = vadd.f32 0.0, %v788
        %v790 = vpop.f32.mrb[0].mxu0
        %v791 = vadd.f32 0.0, %v790
        %792 = vmatprep.mubr.f32.mxu0 0.0
        %793 = vmatmul.mubr.f32.gmra.mrb[0].mxu0 %v702
        %v794 = vpop.f32.mrb[0].mxu0
        %v795 = vadd.f32 0.0, %v794
        %v796 = vpop.f32.mrb[0].mxu0
        %v797 = vadd.f32 0.0, %v796
        %798 = vdwg.mxu0
        %v800 = vsel %vm691, %v645, 0
        %v803 = vsel %vm691, %v646, 0
        %v806 = vsel %vm691, %v647, 0
        %v809 = vsel %vm691, %v648, 0
        %v812 = vsel %vm456, %v643, 0
        %v815 = vsel %vm456, %v644, 0
        %817 = vmatprep.subr.mxu0 %v638
        %818 = vmatpush1.msra.mxu0 %v637
        %819 = vmatprep.subr.mxu0 %v640
        %820 = vmatpush1.msra.mxu0 %v639
        %821 = vmatprep.subr.mxu0 %v642
        %822 = vmatpush1.msra.mxu0 %v641
        %823 = vmatprep.subr.mxu0 %v815
        %824 = vmatpush1.msra.mxu0 %v812
        %825 = vmatprep.subr.mxu0 0.0
        %826 = vmatpush1.msra.mxu0 0.0
        %827 = vmatprep.subr.mxu0 0.0
        %828 = vmatpush1.msra.mxu0 0.0
        %829 = vmatprep.subr.mxu0 0.0
        %830 = vmatpush1.msra.mxu0 0.0
        %831 = vmatprep.subr.mxu0 0.0
        %832 = vmatpush1.msra.mxu0 0.0
        %833 = vmatprep.subr.mxu0 0.0
        %834 = vmatpush1.msra.mxu0 0.0
        %835 = vmatprep.subr.mxu0 0.0
        %836 = vmatpush1.msra.mxu0 0.0
        %837 = vmatprep.subr.mxu0 0.0
        %838 = vmatpush1.msra.mxu0 0.0
        %839 = vmatprep.subr.mxu0 0.0
        %840 = vmatpush1.msra.mxu0 0.0
        %841 = vmatprep.subr.mxu0 0.0
        %842 = vmatpush1.msra.mxu0 0.0
        %843 = vmatprep.subr.mxu0 0.0
        %844 = vmatpush1.msra.mxu0 0.0
        %845 = vmatprep.subr.mxu0 0.0
        %846 = vmatpush1.msra.mxu0 0.0
        %847 = vmatprep.subr.mxu0 0.0
        %848 = vmatpush1.msra.mxu0 0.0
        %849 = vmatprep.subr.mxu0 0.0
        %850 = vmatpush1.msra.mxu0 0.0
        %851 = vmatprep.subr.mxu0 0.0
        %852 = vmatpush1.msra.mxu0 0.0
        %853 = vmatprep.subr.mxu0 0.0
        %854 = vmatpush1.msra.mxu0 0.0
        %855 = vmatprep.subr.mxu0 0.0
        %856 = vmatpush1.msra.mxu0 0.0
        %857 = vmatprep.subr.mxu0 0.0
        %858 = vmatpush1.msra.mxu0 0.0
        %859 = vmatprep.subr.mxu0 0.0
        %860 = vmatpush1.msra.mxu0 0.0
        %861 = vmatprep.subr.mxu0 0.0
        %862 = vmatpush1.msra.mxu0 0.0
        %863 = vmatprep.subr.mxu0 0.0
        %864 = vmatpush1.msra.mxu0 0.0
        %865 = vmatprep.subr.mxu0 0.0
        %866 = vmatpush1.msra.mxu0 0.0
        %867 = vmatprep.subr.mxu0 0.0
        %868 = vmatpush1.msra.mxu0 0.0
        %869 = vmatprep.subr.mxu0 0.0
        %870 = vmatpush1.msra.mxu0 0.0
        %871 = vmatprep.subr.mxu0 0.0
        %872 = vmatpush1.msra.mxu0 0.0
        %873 = vmatprep.subr.mxu0 0.0
        %874 = vmatpush1.msra.mxu0 0.0
        %875 = vmatprep.subr.mxu0 0.0
        %876 = vmatpush1.msra.mxu0 0.0
        %877 = vmatprep.subr.mxu0 0.0
        %878 = vmatpush1.msra.mxu0 0.0
        %879 = vmatprep.subr.mxu0 0.0
        %880 = vmatpush1.msra.mxu0 0.0
        %881 = vmatprep.mubr.f32.mxu0 0.0
        %882 = vmatmul.mubr.f32.gmra.mrb[0].mxu0 %v800
        %v883 = vpop.f32.mrb[0].mxu0
        %v884 = vadd.f32 %v777, %v883
        %v885 = vpop.f32.mrb[0].mxu0
        %v886 = vadd.f32 %v779, %v885
        %887 = vmatprep.mubr.f32.mxu0 0.0
        %888 = vmatmul.mubr.f32.gmra.mrb[0].mxu0 %v803
        %v889 = vpop.f32.mrb[0].mxu0
        %v890 = vadd.f32 %v783, %v889
        %v891 = vpop.f32.mrb[0].mxu0
        %v892 = vadd.f32 %v785, %v891
        %893 = vmatprep.mubr.f32.mxu0 0.0
        %894 = vmatmul.mubr.f32.gmra.mrb[0].mxu0 %v806
        %v895 = vpop.f32.mrb[0].mxu0
        %v896 = vadd.f32 %v789, %v895
        %v897 = vpop.f32.mrb[0].mxu0
        %v898 = vadd.f32 %v791, %v897
        %899 = vmatprep.mubr.f32.mxu0 0.0
        %900 = vmatmul.mubr.f32.gmra.mrb[0].mxu0 %v809
        %v901 = vpop.f32.mrb[0].mxu0
        %v902 = vadd.f32 %v795, %v901
        %v903 = vpop.f32.mrb[0].mxu0
        %v904 = vadd.f32 %v797, %v903
        %905 = vdwg.mxu0
        %906 = vrot.lane.b32.xlu0 %v569, 15
        %v907 = vpop.permute.xlu0 %906
        %908 = vrot.lane.b32.xlu0 %v575, 15
        %v909 = vpop.permute.xlu0 %908
        %910 = vrot.lane.b32.xlu0 %v585, 15
        %v911 = vpop.permute.xlu0 %910
        %912 = vrot.lane.b32.xlu0 %v532, 15
        %v913 = vpop.permute.xlu0 %912
        %914 = vrot.lane.b32.xlu0 %v570, 15
        %v915 = vpop.permute.xlu0 %914
        %916 = vrot.lane.b32.xlu0 %v576, 15
        %v917 = vpop.permute.xlu0 %916
        %918 = vrot.lane.b32.xlu0 %v586, 15
        %v919 = vpop.permute.xlu0 %918
        %920 = vrot.lane.b32.xlu0 %v567, 15
        %v921 = vpop.permute.xlu0 %920
        %vm922 = vcmp.lt.s32.totalorder %v409, 15
        %v923 = vsel %vm922, %v907, %v915
        %v924 = vsel %vm922, %v909, %v917
        %v925 = vsel %vm922, %v911, %v919
        %v926 = vsel %vm922, %v913, %v921
        %v927 = vsel %vm922, %v915, %v907
        %v928 = vsel %vm922, %v917, %v909
        %v929 = vsel %vm922, %v919, %v911
        %v930 = vsel %vm922, %v921, %v913
        %vm931 = vcmp.ne.s32.totalorder %v445, 0
        %vm932 = vcmp.ne.s32.totalorder %v449, 0
        %vm933 = vmand %vm411, %vm931
        %vm934 = vmand %vm412, %vm932
        %v935 = vsel %vm933, 1, 0
        %v936 = vsel %vm934, 1, 0
        %v937 = vlaneseq
        %v938 = vshrl.u32 %v937, 7
        %v939 = vsub.s32 0, %v938
        %v940 = vrot.slane %v935, %v939
        %v941 = vlaneseq
        %v942 = vshrl.u32 %v941, 7
        %v943 = vsub.s32 0, %v942
        %v944 = vrot.slane %v936, %v943
        %vm945 = vcmp.eq.s32.totalorder %v940, 1
        %vm946 = vcmp.eq.s32.totalorder %v944, 1
        %v947 = vsel %vm945, %v927, 0.0
        %v948 = vsel %vm946, %v923, 0.0
        %v949 = vsel %vm945, %v928, 0.0
        %v950 = vsel %vm946, %v924, 0.0
        %v951 = vsel %vm945, %v929, 0.0
        %v952 = vsel %vm946, %v925, 0.0
        %v953 = vsel %vm945, %v930, 0.0
        %v954 = vsel %vm946, %v926, 0.0
        %s955 = scalar_lea.vmem [#allocation10], 64
        %v956 = vld [vmem:[%s955] sm:$0xff]
        %v957 = vld [vmem:[%s955 + $0x8] sm:$0xff]
        %v958 = vld [vmem:[%s955 + $0x10] sm:$0xff]
        %v959 = vld [vmem:[%s955 + $0x18] sm:$0xff]
        %v961 = vsel %vm691, %v956, 0
        %v964 = vsel %vm691, %v957, 0
        %v967 = vsel %vm691, %v958, 0
        %v970 = vsel %vm691, %v959, 0
        %v973 = vsel %vm456, %v953, 0
        %v976 = vsel %vm456, %v954, 0
        %978 = vmatprep.subr.mxu0 %v948
        %979 = vmatpush1.msra.mxu0 %v947
        %980 = vmatprep.subr.mxu0 %v950
        %981 = vmatpush1.msra.mxu0 %v949
        %982 = vmatprep.subr.mxu0 %v952
        %983 = vmatpush1.msra.mxu0 %v951
        %984 = vmatprep.subr.mxu0 %v976
        %985 = vmatpush1.msra.mxu0 %v973
        %986 = vmatprep.subr.mxu0 0.0
        %987 = vmatpush1.msra.mxu0 0.0
        %988 = vmatprep.subr.mxu0 0.0
        %989 = vmatpush1.msra.mxu0 0.0
        %990 = vmatprep.subr.mxu0 0.0
        %991 = vmatpush1.msra.mxu0 0.0
        %992 = vmatprep.subr.mxu0 0.0
        %993 = vmatpush1.msra.mxu0 0.0
        %994 = vmatprep.subr.mxu0 0.0
        %995 = vmatpush1.msra.mxu0 0.0
        %996 = vmatprep.subr.mxu0 0.0
        %997 = vmatpush1.msra.mxu0 0.0
        %998 = vmatprep.subr.mxu0 0.0
        %999 = vmatpush1.msra.mxu0 0.0
        %1000 = vmatprep.subr.mxu0 0.0
        %1001 = vmatpush1.msra.mxu0 0.0
        %1002 = vmatprep.subr.mxu0 0.0
        %1003 = vmatpush1.msra.mxu0 0.0
        %1004 = vmatprep.subr.mxu0 0.0
        %1005 = vmatpush1.msra.mxu0 0.0
        %1006 = vmatprep.subr.mxu0 0.0
        %1007 = vmatpush1.msra.mxu0 0.0
        %1008 = vmatprep.subr.mxu0 0.0
        %1009 = vmatpush1.msra.mxu0 0.0
        %1010 = vmatprep.subr.mxu0 0.0
        %1011 = vmatpush1.msra.mxu0 0.0
        %1012 = vmatprep.subr.mxu0 0.0
        %1013 = vmatpush1.msra.mxu0 0.0
        %1014 = vmatprep.subr.mxu0 0.0
        %1015 = vmatpush1.msra.mxu0 0.0
        %1016 = vmatprep.subr.mxu0 0.0
        %1017 = vmatpush1.msra.mxu0 0.0
        %1018 = vmatprep.subr.mxu0 0.0
        %1019 = vmatpush1.msra.mxu0 0.0
        %1020 = vmatprep.subr.mxu0 0.0
        %1021 = vmatpush1.msra.mxu0 0.0
        %1022 = vmatprep.subr.mxu0 0.0
        %1023 = vmatpush1.msra.mxu0 0.0
        %1024 = vmatprep.subr.mxu0 0.0
        %1025 = vmatpush1.msra.mxu0 0.0
        %1026 = vmatprep.subr.mxu0 0.0
        %1027 = vmatpush1.msra.mxu0 0.0
        %1028 = vmatprep.subr.mxu0 0.0
        %1029 = vmatpush1.msra.mxu0 0.0
        %1030 = vmatprep.subr.mxu0 0.0
        %1031 = vmatpush1.msra.mxu0 0.0
        %1032 = vmatprep.subr.mxu0 0.0
        %1033 = vmatpush1.msra.mxu0 0.0
        %1034 = vmatprep.subr.mxu0 0.0
        %1035 = vmatpush1.msra.mxu0 0.0
        %1036 = vmatprep.subr.mxu0 0.0
        %1037 = vmatpush1.msra.mxu0 0.0
        %1038 = vmatprep.subr.mxu0 0.0
        %1039 = vmatpush1.msra.mxu0 0.0
        %1040 = vmatprep.subr.mxu0 0.0
        %1041 = vmatpush1.msra.mxu0 0.0
        %1042 = vmatprep.mubr.f32.mxu0 0.0
        %1043 = vmatmul.mubr.f32.gmra.mrb[0].mxu0 %v961
        %v1044 = vpop.f32.mrb[0].mxu0
        %v1045 = vadd.f32 0.0, %v1044
        %v1046 = vpop.f32.mrb[0].mxu0
        %v1047 = vadd.f32 0.0, %v1046
        %1048 = vmatprep.mubr.f32.mxu0 0.0
        %1049 = vmatmul.mubr.f32.gmra.mrb[0].mxu0 %v964
        %v1050 = vpop.f32.mrb[0].mxu0
        %v1051 = vadd.f32 0.0, %v1050
        %v1052 = vpop.f32.mrb[0].mxu0
        %v1053 = vadd.f32 0.0, %v1052
        %1054 = vmatprep.mubr.f32.mxu0 0.0
        %1055 = vmatmul.mubr.f32.gmra.mrb[0].mxu0 %v967
        %v1056 = vpop.f32.mrb[0].mxu0
        %v1057 = vadd.f32 0.0, %v1056
        %v1058 = vpop.f32.mrb[0].mxu0
        %v1059 = vadd.f32 0.0, %v1058
        %1060 = vmatprep.mubr.f32.mxu0 0.0
        %1061 = vmatmul.mubr.f32.gmra.mrb[0].mxu0 %v970
        %v1062 = vpop.f32.mrb[0].mxu0
        %v1063 = vadd.f32 0.0, %v1062
        %v1064 = vpop.f32.mrb[0].mxu0
        %v1065 = vadd.f32 0.0, %v1064
        %1066 = vdwg.mxu0
        %v1067 = vadd.f32 %v884, %v1045
        %v1068 = vadd.f32 %v886, %v1047
        %v1069 = vadd.f32 %v890, %v1051
        %v1070 = vadd.f32 %v892, %v1053
        %v1071 = vadd.f32 %v896, %v1057
        %v1072 = vadd.f32 %v898, %v1059
        %v1073 = vadd.f32 %v902, %v1063
        %v1074 = vadd.f32 %v904, %v1065
        %1075 = vrot.lane.b32.xlu0 %v569, 1
        %v1076 = vpop.permute.xlu0 %1075
        %1077 = vrot.lane.b32.xlu0 %v575, 1
        %v1078 = vpop.permute.xlu0 %1077
        %1079 = vrot.lane.b32.xlu0 %v585, 1
        %v1080 = vpop.permute.xlu0 %1079
        %1081 = vrot.lane.b32.xlu0 %v532, 1
        %v1082 = vpop.permute.xlu0 %1081
        %1083 = vrot.lane.b32.xlu0 %v570, 1
        %v1084 = vpop.permute.xlu0 %1083
        %1085 = vrot.lane.b32.xlu0 %v576, 1
        %v1086 = vpop.permute.xlu0 %1085
        %1087 = vrot.lane.b32.xlu0 %v586, 1
        %v1088 = vpop.permute.xlu0 %1087
        %1089 = vrot.lane.b32.xlu0 %v567, 1
        %v1090 = vpop.permute.xlu0 %1089
        %vm1091 = vcmp.lt.s32.totalorder %v409, 1
        %v1092 = vsel %vm1091, %v1076, %v1084
        %v1093 = vsel %vm1091, %v1078, %v1086
        %v1094 = vsel %vm1091, %v1080, %v1088
        %v1095 = vsel %vm1091, %v1082, %v1090
        %v1096 = vsel %vm1091, %v1084, %v1076
        %v1097 = vsel %vm1091, %v1086, %v1078
        %v1098 = vsel %vm1091, %v1088, %v1080
        %v1099 = vsel %vm1091, %v1090, %v1082
        %vm1100 = vcmp.eq.s32.totalorder %v616, 1
        %vm1101 = vcmp.eq.s32.totalorder %v620, 1
        %v1102 = vsel %vm1100, %v1096, 0.0
        %v1103 = vsel %vm1101, %v1092, 0.0
        %v1104 = vsel %vm1100, %v1097, 0.0
        %v1105 = vsel %vm1101, %v1093, 0.0
        %v1106 = vsel %vm1100, %v1098, 0.0
        %v1107 = vsel %vm1101, %v1094, 0.0
        %v1108 = vsel %vm1100, %v1099, 0.0
        %v1109 = vsel %vm1101, %v1095, 0.0
        %s1110 = scalar_lea.vmem [#allocation10], 96
        %v1111 = vld [vmem:[%s1110] sm:$0xff]
        %v1112 = vld [vmem:[%s1110 + $0x8] sm:$0xff]
        %v1113 = vld [vmem:[%s1110 + $0x10] sm:$0xff]
        %v1114 = vld [vmem:[%s1110 + $0x18] sm:$0xff]
        %v1116 = vsel %vm691, %v1111, 0
        %v1119 = vsel %vm691, %v1112, 0
        %v1122 = vsel %vm691, %v1113, 0
        %v1125 = vsel %vm691, %v1114, 0
        %v1128 = vsel %vm456, %v1108, 0
        %v1131 = vsel %vm456, %v1109, 0
        %1133 = vmatprep.subr.mxu0 %v1103
        %1134 = vmatpush1.msra.mxu0 %v1102
        %1135 = vmatprep.subr.mxu0 %v1105
        %1136 = vmatpush1.msra.mxu0 %v1104
        %1137 = vmatprep.subr.mxu0 %v1107
        %1138 = vmatpush1.msra.mxu0 %v1106
        %1139 = vmatprep.subr.mxu0 %v1131
        %1140 = vmatpush1.msra.mxu0 %v1128
        %1141 = vmatprep.subr.mxu0 0.0
        %1142 = vmatpush1.msra.mxu0 0.0
        %1143 = vmatprep.subr.mxu0 0.0
        %1144 = vmatpush1.msra.mxu0 0.0
        %1145 = vmatprep.subr.mxu0 0.0
        %1146 = vmatpush1.msra.mxu0 0.0
        %1147 = vmatprep.subr.mxu0 0.0
        %1148 = vmatpush1.msra.mxu0 0.0
        %1149 = vmatprep.subr.mxu0 0.0
        %1150 = vmatpush1.msra.mxu0 0.0
        %1151 = vmatprep.subr.mxu0 0.0
        %1152 = vmatpush1.msra.mxu0 0.0
        %1153 = vmatprep.subr.mxu0 0.0
        %1154 = vmatpush1.msra.mxu0 0.0
        %1155 = vmatprep.subr.mxu0 0.0
        %1156 = vmatpush1.msra.mxu0 0.0
        %1157 = vmatprep.subr.mxu0 0.0
        %1158 = vmatpush1.msra.mxu0 0.0
        %1159 = vmatprep.subr.mxu0 0.0
        %1160 = vmatpush1.msra.mxu0 0.0
        %1161 = vmatprep.subr.mxu0 0.0
        %1162 = vmatpush1.msra.mxu0 0.0
        %1163 = vmatprep.subr.mxu0 0.0
        %1164 = vmatpush1.msra.mxu0 0.0
        %1165 = vmatprep.subr.mxu0 0.0
        %1166 = vmatpush1.msra.mxu0 0.0
        %1167 = vmatprep.subr.mxu0 0.0
        %1168 = vmatpush1.msra.mxu0 0.0
        %1169 = vmatprep.subr.mxu0 0.0
        %1170 = vmatpush1.msra.mxu0 0.0
        %1171 = vmatprep.subr.mxu0 0.0
        %1172 = vmatpush1.msra.mxu0 0.0
        %1173 = vmatprep.subr.mxu0 0.0
        %1174 = vmatpush1.msra.mxu0 0.0
        %1175 = vmatprep.subr.mxu0 0.0
        %1176 = vmatpush1.msra.mxu0 0.0
        %1177 = vmatprep.subr.mxu0 0.0
        %1178 = vmatpush1.msra.mxu0 0.0
        %1179 = vmatprep.subr.mxu0 0.0
        %1180 = vmatpush1.msra.mxu0 0.0
        %1181 = vmatprep.subr.mxu0 0.0
        %1182 = vmatpush1.msra.mxu0 0.0
        %1183 = vmatprep.subr.mxu0 0.0
        %1184 = vmatpush1.msra.mxu0 0.0
        %1185 = vmatprep.subr.mxu0 0.0
        %1186 = vmatpush1.msra.mxu0 0.0
        %1187 = vmatprep.subr.mxu0 0.0
        %1188 = vmatpush1.msra.mxu0 0.0
        %1189 = vmatprep.subr.mxu0 0.0
        %1190 = vmatpush1.msra.mxu0 0.0
        %1191 = vmatprep.subr.mxu0 0.0
        %1192 = vmatpush1.msra.mxu0 0.0
        %1193 = vmatprep.subr.mxu0 0.0
        %1194 = vmatpush1.msra.mxu0 0.0
        %1195 = vmatprep.subr.mxu0 0.0
        %1196 = vmatpush1.msra.mxu0 0.0
        %1197 = vmatprep.mubr.f32.mxu0 0.0
        %1198 = vmatmul.mubr.f32.gmra.mrb[0].mxu0 %v1116
        %v1199 = vpop.f32.mrb[0].mxu0
        %v1200 = vadd.f32 0.0, %v1199
        %v1201 = vpop.f32.mrb[0].mxu0
        %v1202 = vadd.f32 0.0, %v1201
        %1203 = vmatprep.mubr.f32.mxu0 0.0
        %1204 = vmatmul.mubr.f32.gmra.mrb[0].mxu0 %v1119
        %v1205 = vpop.f32.mrb[0].mxu0
        %v1206 = vadd.f32 0.0, %v1205
        %v1207 = vpop.f32.mrb[0].mxu0
        %v1208 = vadd.f32 0.0, %v1207
        %1209 = vmatprep.mubr.f32.mxu0 0.0
        %1210 = vmatmul.mubr.f32.gmra.mrb[0].mxu0 %v1122
        %v1211 = vpop.f32.mrb[0].mxu0
        %v1212 = vadd.f32 0.0, %v1211
        %v1213 = vpop.f32.mrb[0].mxu0
        %v1214 = vadd.f32 0.0, %v1213
        %1215 = vmatprep.mubr.f32.mxu0 0.0
        %1216 = vmatmul.mubr.f32.gmra.mrb[0].mxu0 %v1125
        %v1217 = vpop.f32.mrb[0].mxu0
        %v1218 = vadd.f32 0.0, %v1217
        %v1219 = vpop.f32.mrb[0].mxu0
        %v1220 = vadd.f32 0.0, %v1219
        %1221 = vdwg.mxu0
        %v1222 = vadd.f32 %v1067, %v1200
        %v1223 = vadd.f32 %v1068, %v1202
        %v1224 = vadd.f32 %v1069, %v1206
        %v1225 = vadd.f32 %v1070, %v1208
        %v1226 = vadd.f32 %v1071, %v1212
        %v1227 = vadd.f32 %v1072, %v1214
        %v1228 = vadd.f32 %v1073, %v1218
        %v1229 = vadd.f32 %v1074, %v1220
        %s1230 = scalar_lea.vmem [#allocation10], 128
        %v1231 = vld [vmem:[%s1230] sm:$0xff]
        %v1232 = vld [vmem:[%s1230 + $0x8] sm:$0xff]
        %v1233 = vld [vmem:[%s1230 + $0x10] sm:$0xff]
        %v1234 = vld [vmem:[%s1230 + $0x18] sm:$0xff]
        %v1236 = vsel %vm691, %v1231, 0
        %v1239 = vsel %vm691, %v1232, 0
        %v1242 = vsel %vm691, %v1233, 0
        %v1245 = vsel %vm691, %v1234, 0
        %v1247 = vsel %vm456, %v532, 0
        %v1249 = vsel %vm456, %v567, 0
        %1251 = vmatprep.subr.mxu0 %v570
        %1252 = vmatpush1.msra.mxu0 %v569
        %1253 = vmatprep.subr.mxu0 %v576
        %1254 = vmatpush1.msra.mxu0 %v575
        %1255 = vmatprep.subr.mxu0 %v586
        %1256 = vmatpush1.msra.mxu0 %v585
        %1257 = vmatprep.subr.mxu0 %v1249
        %1258 = vmatpush1.msra.mxu0 %v1247
        %1259 = vmatprep.subr.mxu0 0.0
        %1260 = vmatpush1.msra.mxu0 0.0
        %1261 = vmatprep.subr.mxu0 0.0
        %1262 = vmatpush1.msra.mxu0 0.0
        %1263 = vmatprep.subr.mxu0 0.0
        %1264 = vmatpush1.msra.mxu0 0.0
        %1265 = vmatprep.subr.mxu0 0.0
        %1266 = vmatpush1.msra.mxu0 0.0
        %1267 = vmatprep.subr.mxu0 0.0
        %1268 = vmatpush1.msra.mxu0 0.0
        %1269 = vmatprep.subr.mxu0 0.0
        %1270 = vmatpush1.msra.mxu0 0.0
        %1271 = vmatprep.subr.mxu0 0.0
        %1272 = vmatpush1.msra.mxu0 0.0
        %1273 = vmatprep.subr.mxu0 0.0
        %1274 = vmatpush1.msra.mxu0 0.0
        %1275 = vmatprep.subr.mxu0 0.0
        %1276 = vmatpush1.msra.mxu0 0.0
        %1277 = vmatprep.subr.mxu0 0.0
        %1278 = vmatpush1.msra.mxu0 0.0
        %1279 = vmatprep.subr.mxu0 0.0
        %1280 = vmatpush1.msra.mxu0 0.0
        %1281 = vmatprep.subr.mxu0 0.0
        %1282 = vmatpush1.msra.mxu0 0.0
        %1283 = vmatprep.subr.mxu0 0.0
        %1284 = vmatpush1.msra.mxu0 0.0
        %1285 = vmatprep.subr.mxu0 0.0
        %1286 = vmatpush1.msra.mxu0 0.0
        %1287 = vmatprep.subr.mxu0 0.0
        %1288 = vmatpush1.msra.mxu0 0.0
        %1289 = vmatprep.subr.mxu0 0.0
        %1290 = vmatpush1.msra.mxu0 0.0
        %1291 = vmatprep.subr.mxu0 0.0
        %1292 = vmatpush1.msra.mxu0 0.0
        %1293 = vmatprep.subr.mxu0 0.0
        %1294 = vmatpush1.msra.mxu0 0.0
        %1295 = vmatprep.subr.mxu0 0.0
        %1296 = vmatpush1.msra.mxu0 0.0
        %1297 = vmatprep.subr.mxu0 0.0
        %1298 = vmatpush1.msra.mxu0 0.0
        %1299 = vmatprep.subr.mxu0 0.0
        %1300 = vmatpush1.msra.mxu0 0.0
        %1301 = vmatprep.subr.mxu0 0.0
        %1302 = vmatpush1.msra.mxu0 0.0
        %1303 = vmatprep.subr.mxu0 0.0
        %1304 = vmatpush1.msra.mxu0 0.0
        %1305 = vmatprep.subr.mxu0 0.0
        %1306 = vmatpush1.msra.mxu0 0.0
        %1307 = vmatprep.subr.mxu0 0.0
        %1308 = vmatpush1.msra.mxu0 0.0
        %1309 = vmatprep.subr.mxu0 0.0
        %1310 = vmatpush1.msra.mxu0 0.0
        %1311 = vmatprep.subr.mxu0 0.0
        %1312 = vmatpush1.msra.mxu0 0.0
        %1313 = vmatprep.subr.mxu0 0.0
        %1314 = vmatpush1.msra.mxu0 0.0
        %1315 = vmatprep.mubr.f32.mxu0 0.0
        %1316 = vmatmul.mubr.f32.gmra.mrb[0].mxu0 %v1236
        %v1317 = vpop.f32.mrb[0].mxu0
        %v1318 = vadd.f32 0.0, %v1317
        %v1319 = vpop.f32.mrb[0].mxu0
        %v1320 = vadd.f32 0.0, %v1319
        %1321 = vmatprep.mubr.f32.mxu0 0.0
        %1322 = vmatmul.mubr.f32.gmra.mrb[0].mxu0 %v1239
        %v1323 = vpop.f32.mrb[0].mxu0
        %v1324 = vadd.f32 0.0, %v1323
        %v1325 = vpop.f32.mrb[0].mxu0
        %v1326 = vadd.f32 0.0, %v1325
        %1327 = vmatprep.mubr.f32.mxu0 0.0
        %1328 = vmatmul.mubr.f32.gmra.mrb[0].mxu0 %v1242
        %v1329 = vpop.f32.mrb[0].mxu0
        %v1330 = vadd.f32 0.0, %v1329
        %v1331 = vpop.f32.mrb[0].mxu0
        %v1332 = vadd.f32 0.0, %v1331
        %1333 = vmatprep.mubr.f32.mxu0 0.0
        %1334 = vmatmul.mubr.f32.gmra.mrb[0].mxu0 %v1245
        %v1335 = vpop.f32.mrb[0].mxu0
        %v1336 = vadd.f32 0.0, %v1335
        %v1337 = vpop.f32.mrb[0].mxu0
        %v1338 = vadd.f32 0.0, %v1337
        %1339 = vdwg.mxu0
        %v1340 = vadd.f32 %v1222, %v1318
        %v1341 = vadd.f32 %v1223, %v1320
        %v1342 = vadd.f32 %v1224, %v1324
        %v1343 = vadd.f32 %v1225, %v1326
        %v1344 = vadd.f32 %v1226, %v1330
        %v1345 = vadd.f32 %v1227, %v1332
        %v1346 = vadd.f32 %v1228, %v1336
        %v1347 = vadd.f32 %v1229, %v1338
        %1348 = vrot.lane.b32.xlu0 %v569, 127
        %v1349 = vpop.permute.xlu0 %1348
        %1350 = vrot.lane.b32.xlu0 %v575, 127
        %v1351 = vpop.permute.xlu0 %1350
        %1352 = vrot.lane.b32.xlu0 %v585, 127
        %v1353 = vpop.permute.xlu0 %1352
        %1354 = vrot.lane.b32.xlu0 %v532, 127
        %v1355 = vpop.permute.xlu0 %1354
        %1356 = vrot.lane.b32.xlu0 %v570, 127
        %v1357 = vpop.permute.xlu0 %1356
        %1358 = vrot.lane.b32.xlu0 %v576, 127
        %v1359 = vpop.permute.xlu0 %1358
        %1360 = vrot.lane.b32.xlu0 %v586, 127
        %v1361 = vpop.permute.xlu0 %1360
        %1362 = vrot.lane.b32.xlu0 %v567, 127
        %v1363 = vpop.permute.xlu0 %1362
        %v1364 = vsel %vm428, %v1349, %v1357
        %v1365 = vsel %vm428, %v1351, %v1359
        %v1366 = vsel %vm428, %v1353, %v1361
        %v1367 = vsel %vm428, %v1355, %v1363
        %v1368 = vsel %vm428, %v1357, %v1349
        %v1369 = vsel %vm428, %v1359, %v1351
        %v1370 = vsel %vm428, %v1361, %v1353
        %v1371 = vsel %vm428, %v1363, %v1355
        %v1372 = vsel %vm450, %v1364, 0.0
        %v1373 = vsel %vm451, %v1368, 0.0
        %v1374 = vsel %vm450, %v1365, 0.0
        %v1375 = vsel %vm451, %v1369, 0.0
        %v1376 = vsel %vm450, %v1366, 0.0
        %v1377 = vsel %vm451, %v1370, 0.0
        %v1378 = vsel %vm450, %v1367, 0.0
        %v1379 = vsel %vm451, %v1371, 0.0
        %s1380 = scalar_lea.vmem [#allocation10], 160
        %v1381 = vld [vmem:[%s1380] sm:$0xff]
        %v1382 = vld [vmem:[%s1380 + $0x8] sm:$0xff]
        %v1383 = vld [vmem:[%s1380 + $0x10] sm:$0xff]
        %v1384 = vld [vmem:[%s1380 + $0x18] sm:$0xff]
        %v1386 = vsel %vm691, %v1381, 0
        %v1389 = vsel %vm691, %v1382, 0
        %v1392 = vsel %vm691, %v1383, 0
        %v1395 = vsel %vm691, %v1384, 0
        %v1398 = vsel %vm456, %v1378, 0
        %v1401 = vsel %vm456, %v1379, 0
        %1403 = vmatprep.subr.mxu0 %v1373
        %1404 = vmatpush1.msra.mxu0 %v1372
        %1405 = vmatprep.subr.mxu0 %v1375
        %1406 = vmatpush1.msra.mxu0 %v1374
        %1407 = vmatprep.subr.mxu0 %v1377
        %1408 = vmatpush1.msra.mxu0 %v1376
        %1409 = vmatprep.subr.mxu0 %v1401
        %1410 = vmatpush1.msra.mxu0 %v1398
        %1411 = vmatprep.subr.mxu0 0.0
        %1412 = vmatpush1.msra.mxu0 0.0
        %1413 = vmatprep.subr.mxu0 0.0
        %1414 = vmatpush1.msra.mxu0 0.0
        %1415 = vmatprep.subr.mxu0 0.0
        %1416 = vmatpush1.msra.mxu0 0.0
        %1417 = vmatprep.subr.mxu0 0.0
        %1418 = vmatpush1.msra.mxu0 0.0
        %1419 = vmatprep.subr.mxu0 0.0
        %1420 = vmatpush1.msra.mxu0 0.0
        %1421 = vmatprep.subr.mxu0 0.0
        %1422 = vmatpush1.msra.mxu0 0.0
        %1423 = vmatprep.subr.mxu0 0.0
        %1424 = vmatpush1.msra.mxu0 0.0
        %1425 = vmatprep.subr.mxu0 0.0
        %1426 = vmatpush1.msra.mxu0 0.0
        %1427 = vmatprep.subr.mxu0 0.0
        %1428 = vmatpush1.msra.mxu0 0.0
        %1429 = vmatprep.subr.mxu0 0.0
        %1430 = vmatpush1.msra.mxu0 0.0
        %1431 = vmatprep.subr.mxu0 0.0
        %1432 = vmatpush1.msra.mxu0 0.0
        %1433 = vmatprep.subr.mxu0 0.0
        %1434 = vmatpush1.msra.mxu0 0.0
        %1435 = vmatprep.subr.mxu0 0.0
        %1436 = vmatpush1.msra.mxu0 0.0
        %1437 = vmatprep.subr.mxu0 0.0
        %1438 = vmatpush1.msra.mxu0 0.0
        %1439 = vmatprep.subr.mxu0 0.0
        %1440 = vmatpush1.msra.mxu0 0.0
        %1441 = vmatprep.subr.mxu0 0.0
        %1442 = vmatpush1.msra.mxu0 0.0
        %1443 = vmatprep.subr.mxu0 0.0
        %1444 = vmatpush1.msra.mxu0 0.0
        %1445 = vmatprep.subr.mxu0 0.0
        %1446 = vmatpush1.msra.mxu0 0.0
        %1447 = vmatprep.subr.mxu0 0.0
        %1448 = vmatpush1.msra.mxu0 0.0
        %1449 = vmatprep.subr.mxu0 0.0
        %1450 = vmatpush1.msra.mxu0 0.0
        %1451 = vmatprep.subr.mxu0 0.0
        %1452 = vmatpush1.msra.mxu0 0.0
        %1453 = vmatprep.subr.mxu0 0.0
        %1454 = vmatpush1.msra.mxu0 0.0
        %1455 = vmatprep.subr.mxu0 0.0
        %1456 = vmatpush1.msra.mxu0 0.0
        %1457 = vmatprep.subr.mxu0 0.0
        %1458 = vmatpush1.msra.mxu0 0.0
        %1459 = vmatprep.subr.mxu0 0.0
        %1460 = vmatpush1.msra.mxu0 0.0
        %1461 = vmatprep.subr.mxu0 0.0
        %1462 = vmatpush1.msra.mxu0 0.0
        %1463 = vmatprep.subr.mxu0 0.0
        %1464 = vmatpush1.msra.mxu0 0.0
        %1465 = vmatprep.subr.mxu0 0.0
        %1466 = vmatpush1.msra.mxu0 0.0
        %1467 = vmatprep.mubr.f32.mxu0 0.0
        %1468 = vmatmul.mubr.f32.gmra.mrb[0].mxu0 %v1386
        %v1469 = vpop.f32.mrb[0].mxu0
        %v1470 = vadd.f32 0.0, %v1469
        %v1471 = vpop.f32.mrb[0].mxu0
        %v1472 = vadd.f32 0.0, %v1471
        %1473 = vmatprep.mubr.f32.mxu0 0.0
        %1474 = vmatmul.mubr.f32.gmra.mrb[0].mxu0 %v1389
        %v1475 = vpop.f32.mrb[0].mxu0
        %v1476 = vadd.f32 0.0, %v1475
        %v1477 = vpop.f32.mrb[0].mxu0
        %v1478 = vadd.f32 0.0, %v1477
        %1479 = vmatprep.mubr.f32.mxu0 0.0
        %1480 = vmatmul.mubr.f32.gmra.mrb[0].mxu0 %v1392
        %v1481 = vpop.f32.mrb[0].mxu0
        %v1482 = vadd.f32 0.0, %v1481
        %v1483 = vpop.f32.mrb[0].mxu0
        %v1484 = vadd.f32 0.0, %v1483
        %1485 = vmatprep.mubr.f32.mxu0 0.0
        %1486 = vmatmul.mubr.f32.gmra.mrb[0].mxu0 %v1395
        %v1487 = vpop.f32.mrb[0].mxu0
        %v1488 = vadd.f32 0.0, %v1487
        %v1489 = vpop.f32.mrb[0].mxu0
        %v1490 = vadd.f32 0.0, %v1489
        %1491 = vdwg.mxu0
        %v1492 = vadd.f32 %v1340, %v1470
        %v1493 = vadd.f32 %v1341, %v1472
        %v1494 = vadd.f32 %v1342, %v1476
        %v1495 = vadd.f32 %v1343, %v1478
        %v1496 = vadd.f32 %v1344, %v1482
        %v1497 = vadd.f32 %v1345, %v1484
        %v1498 = vadd.f32 %v1346, %v1488
        %v1499 = vadd.f32 %v1347, %v1490
        %1500 = vrot.lane.b32.xlu0 %v569, 113
        %v1501 = vpop.permute.xlu0 %1500
        %1502 = vrot.lane.b32.xlu0 %v575, 113
        %v1503 = vpop.permute.xlu0 %1502
        %1504 = vrot.lane.b32.xlu0 %v585, 113
        %v1505 = vpop.permute.xlu0 %1504
        %1506 = vrot.lane.b32.xlu0 %v532, 113
        %v1507 = vpop.permute.xlu0 %1506
        %1508 = vrot.lane.b32.xlu0 %v570, 113
        %v1509 = vpop.permute.xlu0 %1508
        %1510 = vrot.lane.b32.xlu0 %v576, 113
        %v1511 = vpop.permute.xlu0 %1510
        %1512 = vrot.lane.b32.xlu0 %v586, 113
        %v1513 = vpop.permute.xlu0 %1512
        %1514 = vrot.lane.b32.xlu0 %v567, 113
        %v1515 = vpop.permute.xlu0 %1514
        %vm1516 = vcmp.lt.s32.totalorder %v409, 113
        %v1517 = vsel %vm1516, %v1501, %v1509
        %v1518 = vsel %vm1516, %v1503, %v1511
        %v1519 = vsel %vm1516, %v1505, %v1513
        %v1520 = vsel %vm1516, %v1507, %v1515
        %v1521 = vsel %vm1516, %v1509, %v1501
        %v1522 = vsel %vm1516, %v1511, %v1503
        %v1523 = vsel %vm1516, %v1513, %v1505
        %v1524 = vsel %vm1516, %v1515, %v1507
        %vm1525 = vmand %vm413, %vm621
        %vm1526 = vmand %vm414, %vm622
        %v1527 = vsel %vm1525, 1, 0
        %v1528 = vsel %vm1526, 1, 0
        %v1529 = vlaneseq
        %v1530 = vshrl.u32 %v1529, 7
        %v1531 = vsub.s32 0, %v1530
        %v1532 = vrot.slane %v1527, %v1531
        %v1533 = vlaneseq
        %v1534 = vshrl.u32 %v1533, 7
        %v1535 = vsub.s32 0, %v1534
        %v1536 = vrot.slane %v1528, %v1535
        %vm1537 = vcmp.eq.s32.totalorder %v1532, 1
        %vm1538 = vcmp.eq.s32.totalorder %v1536, 1
        %v1539 = vsel %vm1537, %v1517, 0.0
        %v1540 = vsel %vm1538, %v1521, 0.0
        %v1541 = vsel %vm1537, %v1518, 0.0
        %v1542 = vsel %vm1538, %v1522, 0.0
        %v1543 = vsel %vm1537, %v1519, 0.0
        %v1544 = vsel %vm1538, %v1523, 0.0
        %v1545 = vsel %vm1537, %v1520, 0.0
        %v1546 = vsel %vm1538, %v1524, 0.0
        %s1547 = scalar_lea.vmem [#allocation10], 192
        %v1548 = vld [vmem:[%s1547] sm:$0xff]
        %v1549 = vld [vmem:[%s1547 + $0x8] sm:$0xff]
        %v1550 = vld [vmem:[%s1547 + $0x10] sm:$0xff]
        %v1551 = vld [vmem:[%s1547 + $0x18] sm:$0xff]
        %v1553 = vsel %vm691, %v1548, 0
        %v1556 = vsel %vm691, %v1549, 0
        %v1559 = vsel %vm691, %v1550, 0
        %v1562 = vsel %vm691, %v1551, 0
        %v1565 = vsel %vm456, %v1545, 0
        %v1568 = vsel %vm456, %v1546, 0
        %1570 = vmatprep.subr.mxu0 %v1540
        %1571 = vmatpush1.msra.mxu0 %v1539
        %1572 = vmatprep.subr.mxu0 %v1542
        %1573 = vmatpush1.msra.mxu0 %v1541
        %1574 = vmatprep.subr.mxu0 %v1544
        %1575 = vmatpush1.msra.mxu0 %v1543
        %1576 = vmatprep.subr.mxu0 %v1568
        %1577 = vmatpush1.msra.mxu0 %v1565
        %1578 = vmatprep.subr.mxu0 0.0
        %1579 = vmatpush1.msra.mxu0 0.0
        %1580 = vmatprep.subr.mxu0 0.0
        %1581 = vmatpush1.msra.mxu0 0.0
        %1582 = vmatprep.subr.mxu0 0.0
        %1583 = vmatpush1.msra.mxu0 0.0
        %1584 = vmatprep.subr.mxu0 0.0
        %1585 = vmatpush1.msra.mxu0 0.0
        %1586 = vmatprep.subr.mxu0 0.0
        %1587 = vmatpush1.msra.mxu0 0.0
        %1588 = vmatprep.subr.mxu0 0.0
        %1589 = vmatpush1.msra.mxu0 0.0
        %1590 = vmatprep.subr.mxu0 0.0
        %1591 = vmatpush1.msra.mxu0 0.0
        %1592 = vmatprep.subr.mxu0 0.0
        %1593 = vmatpush1.msra.mxu0 0.0
        %1594 = vmatprep.subr.mxu0 0.0
        %1595 = vmatpush1.msra.mxu0 0.0
        %1596 = vmatprep.subr.mxu0 0.0
        %1597 = vmatpush1.msra.mxu0 0.0
        %1598 = vmatprep.subr.mxu0 0.0
        %1599 = vmatpush1.msra.mxu0 0.0
        %1600 = vmatprep.subr.mxu0 0.0
        %1601 = vmatpush1.msra.mxu0 0.0
        %1602 = vmatprep.subr.mxu0 0.0
        %1603 = vmatpush1.msra.mxu0 0.0
        %1604 = vmatprep.subr.mxu0 0.0
        %1605 = vmatpush1.msra.mxu0 0.0
        %1606 = vmatprep.subr.mxu0 0.0
        %1607 = vmatpush1.msra.mxu0 0.0
        %1608 = vmatprep.subr.mxu0 0.0
        %1609 = vmatpush1.msra.mxu0 0.0
        %1610 = vmatprep.subr.mxu0 0.0
        %1611 = vmatpush1.msra.mxu0 0.0
        %1612 = vmatprep.subr.mxu0 0.0
        %1613 = vmatpush1.msra.mxu0 0.0
        %1614 = vmatprep.subr.mxu0 0.0
        %1615 = vmatpush1.msra.mxu0 0.0
        %1616 = vmatprep.subr.mxu0 0.0
        %1617 = vmatpush1.msra.mxu0 0.0
        %1618 = vmatprep.subr.mxu0 0.0
        %1619 = vmatpush1.msra.mxu0 0.0
        %1620 = vmatprep.subr.mxu0 0.0
        %1621 = vmatpush1.msra.mxu0 0.0
        %1622 = vmatprep.subr.mxu0 0.0
        %1623 = vmatpush1.msra.mxu0 0.0
        %1624 = vmatprep.subr.mxu0 0.0
        %1625 = vmatpush1.msra.mxu0 0.0
        %1626 = vmatprep.subr.mxu0 0.0
        %1627 = vmatpush1.msra.mxu0 0.0
        %1628 = vmatprep.subr.mxu0 0.0
        %1629 = vmatpush1.msra.mxu0 0.0
        %1630 = vmatprep.subr.mxu0 0.0
        %1631 = vmatpush1.msra.mxu0 0.0
        %1632 = vmatprep.subr.mxu0 0.0
        %1633 = vmatpush1.msra.mxu0 0.0
        %1634 = vmatprep.mubr.f32.mxu0 0.0
        %1635 = vmatmul.mubr.f32.gmra.mrb[0].mxu0 %v1553
        %v1636 = vpop.f32.mrb[0].mxu0
        %v1637 = vadd.f32 0.0, %v1636
        %v1638 = vpop.f32.mrb[0].mxu0
        %v1639 = vadd.f32 0.0, %v1638
        %1640 = vmatprep.mubr.f32.mxu0 0.0
        %1641 = vmatmul.mubr.f32.gmra.mrb[0].mxu0 %v1556
        %v1642 = vpop.f32.mrb[0].mxu0
        %v1643 = vadd.f32 0.0, %v1642
        %v1644 = vpop.f32.mrb[0].mxu0
        %v1645 = vadd.f32 0.0, %v1644
        %1646 = vmatprep.mubr.f32.mxu0 0.0
        %1647 = vmatmul.mubr.f32.gmra.mrb[0].mxu0 %v1559
        %v1648 = vpop.f32.mrb[0].mxu0
        %v1649 = vadd.f32 0.0, %v1648
        %v1650 = vpop.f32.mrb[0].mxu0
        %v1651 = vadd.f32 0.0, %v1650
        %1652 = vmatprep.mubr.f32.mxu0 0.0
        %1653 = vmatmul.mubr.f32.gmra.mrb[0].mxu0 %v1562
        %v1654 = vpop.f32.mrb[0].mxu0
        %v1655 = vadd.f32 0.0, %v1654
        %v1656 = vpop.f32.mrb[0].mxu0
        %v1657 = vadd.f32 0.0, %v1656
        %1658 = vdwg.mxu0
        %v1659 = vadd.f32 %v1492, %v1637
        %v1660 = vadd.f32 %v1493, %v1639
        %v1661 = vadd.f32 %v1494, %v1643
        %v1662 = vadd.f32 %v1495, %v1645
        %v1663 = vadd.f32 %v1496, %v1649
        %v1664 = vadd.f32 %v1497, %v1651
        %v1665 = vadd.f32 %v1498, %v1655
        %v1666 = vadd.f32 %v1499, %v1657
        %1667 = vrot.lane.b32.xlu0 %v569, 112
        %v1668 = vpop.permute.xlu0 %1667
        %1669 = vrot.lane.b32.xlu0 %v575, 112
        %v1670 = vpop.permute.xlu0 %1669
        %1671 = vrot.lane.b32.xlu0 %v585, 112
        %v1672 = vpop.permute.xlu0 %1671
        %1673 = vrot.lane.b32.xlu0 %v532, 112
        %v1674 = vpop.permute.xlu0 %1673
        %1675 = vrot.lane.b32.xlu0 %v570, 112
        %v1676 = vpop.permute.xlu0 %1675
        %1677 = vrot.lane.b32.xlu0 %v576, 112
        %v1678 = vpop.permute.xlu0 %1677
        %1679 = vrot.lane.b32.xlu0 %v586, 112
        %v1680 = vpop.permute.xlu0 %1679
        %1681 = vrot.lane.b32.xlu0 %v567, 112
        %v1682 = vpop.permute.xlu0 %1681
        %v1683 = vsel %vm421, %v1668, %v1676
        %v1684 = vsel %vm421, %v1670, %v1678
        %v1685 = vsel %vm421, %v1672, %v1680
        %v1686 = vsel %vm421, %v1674, %v1682
        %v1687 = vsel %vm421, %v1676, %v1668
        %v1688 = vsel %vm421, %v1678, %v1670
        %v1689 = vsel %vm421, %v1680, %v1672
        %v1690 = vsel %vm421, %v1682, %v1674
        %v1691 = vsel %vm435, %v1683, 0.0
        %v1692 = vsel %vm436, %v1687, 0.0
        %v1693 = vsel %vm435, %v1684, 0.0
        %v1694 = vsel %vm436, %v1688, 0.0
        %v1695 = vsel %vm435, %v1685, 0.0
        %v1696 = vsel %vm436, %v1689, 0.0
        %v1697 = vsel %vm435, %v1686, 0.0
        %v1698 = vsel %vm436, %v1690, 0.0
        %s1699 = scalar_lea.vmem [#allocation10], 224
        %v1700 = vld [vmem:[%s1699] sm:$0xff]
        %v1701 = vld [vmem:[%s1699 + $0x8] sm:$0xff]
        %v1702 = vld [vmem:[%s1699 + $0x10] sm:$0xff]
        %v1703 = vld [vmem:[%s1699 + $0x18] sm:$0xff]
        %v1705 = vsel %vm691, %v1700, 0
        %v1708 = vsel %vm691, %v1701, 0
        %v1711 = vsel %vm691, %v1702, 0
        %v1714 = vsel %vm691, %v1703, 0
        %v1717 = vsel %vm456, %v1697, 0
        %v1720 = vsel %vm456, %v1698, 0
        %1722 = vmatprep.subr.mxu0 %v1692
        %1723 = vmatpush1.msra.mxu0 %v1691
        %1724 = vmatprep.subr.mxu0 %v1694
        %1725 = vmatpush1.msra.mxu0 %v1693
        %1726 = vmatprep.subr.mxu0 %v1696
        %1727 = vmatpush1.msra.mxu0 %v1695
        %1728 = vmatprep.subr.mxu0 %v1720
        %1729 = vmatpush1.msra.mxu0 %v1717
        %1730 = vmatprep.subr.mxu0 0.0
        %1731 = vmatpush1.msra.mxu0 0.0
        %1732 = vmatprep.subr.mxu0 0.0
        %1733 = vmatpush1.msra.mxu0 0.0
        %1734 = vmatprep.subr.mxu0 0.0
        %1735 = vmatpush1.msra.mxu0 0.0
        %1736 = vmatprep.subr.mxu0 0.0
        %1737 = vmatpush1.msra.mxu0 0.0
        %1738 = vmatprep.subr.mxu0 0.0
        %1739 = vmatpush1.msra.mxu0 0.0
        %1740 = vmatprep.subr.mxu0 0.0
        %1741 = vmatpush1.msra.mxu0 0.0
        %1742 = vmatprep.subr.mxu0 0.0
        %1743 = vmatpush1.msra.mxu0 0.0
        %1744 = vmatprep.subr.mxu0 0.0
        %1745 = vmatpush1.msra.mxu0 0.0
        %1746 = vmatprep.subr.mxu0 0.0
        %1747 = vmatpush1.msra.mxu0 0.0
        %1748 = vmatprep.subr.mxu0 0.0
        %1749 = vmatpush1.msra.mxu0 0.0
        %1750 = vmatprep.subr.mxu0 0.0
        %1751 = vmatpush1.msra.mxu0 0.0
        %1752 = vmatprep.subr.mxu0 0.0
        %1753 = vmatpush1.msra.mxu0 0.0
        %1754 = vmatprep.subr.mxu0 0.0
        %1755 = vmatpush1.msra.mxu0 0.0
        %1756 = vmatprep.subr.mxu0 0.0
        %1757 = vmatpush1.msra.mxu0 0.0
        %1758 = vmatprep.subr.mxu0 0.0
        %1759 = vmatpush1.msra.mxu0 0.0
        %1760 = vmatprep.subr.mxu0 0.0
        %1761 = vmatpush1.msra.mxu0 0.0
        %1762 = vmatprep.subr.mxu0 0.0
        %1763 = vmatpush1.msra.mxu0 0.0
        %1764 = vmatprep.subr.mxu0 0.0
        %1765 = vmatpush1.msra.mxu0 0.0
        %1766 = vmatprep.subr.mxu0 0.0
        %1767 = vmatpush1.msra.mxu0 0.0
        %1768 = vmatprep.subr.mxu0 0.0
        %1769 = vmatpush1.msra.mxu0 0.0
        %1770 = vmatprep.subr.mxu0 0.0
        %1771 = vmatpush1.msra.mxu0 0.0
        %1772 = vmatprep.subr.mxu0 0.0
        %1773 = vmatpush1.msra.mxu0 0.0
        %1774 = vmatprep.subr.mxu0 0.0
        %1775 = vmatpush1.msra.mxu0 0.0
        %1776 = vmatprep.subr.mxu0 0.0
        %1777 = vmatpush1.msra.mxu0 0.0
        %1778 = vmatprep.subr.mxu0 0.0
        %1779 = vmatpush1.msra.mxu0 0.0
        %1780 = vmatprep.subr.mxu0 0.0
        %1781 = vmatpush1.msra.mxu0 0.0
        %1782 = vmatprep.subr.mxu0 0.0
        %1783 = vmatpush1.msra.mxu0 0.0
        %1784 = vmatprep.subr.mxu0 0.0
        %1785 = vmatpush1.msra.mxu0 0.0
        %1786 = vmatprep.mubr.f32.mxu0 0.0
        %1787 = vmatmul.mubr.f32.gmra.mrb[0].mxu0 %v1705
        %v1788 = vpop.f32.mrb[0].mxu0
        %v1789 = vadd.f32 0.0, %v1788
        %v1790 = vpop.f32.mrb[0].mxu0
        %v1791 = vadd.f32 0.0, %v1790
        %1792 = vmatprep.mubr.f32.mxu0 0.0
        %1793 = vmatmul.mubr.f32.gmra.mrb[0].mxu0 %v1708
        %v1794 = vpop.f32.mrb[0].mxu0
        %v1795 = vadd.f32 0.0, %v1794
        %v1796 = vpop.f32.mrb[0].mxu0
        %v1797 = vadd.f32 0.0, %v1796
        %1798 = vmatprep.mubr.f32.mxu0 0.0
        %1799 = vmatmul.mubr.f32.gmra.mrb[0].mxu0 %v1711
        %v1800 = vpop.f32.mrb[0].mxu0
        %v1801 = vadd.f32 0.0, %v1800
        %v1802 = vpop.f32.mrb[0].mxu0
        %v1803 = vadd.f32 0.0, %v1802
        %1804 = vmatprep.mubr.f32.mxu0 0.0
        %1805 = vmatmul.mubr.f32.gmra.mrb[0].mxu0 %v1714
        %v1806 = vpop.f32.mrb[0].mxu0
        %v1807 = vadd.f32 0.0, %v1806
        %v1808 = vpop.f32.mrb[0].mxu0
        %v1809 = vadd.f32 0.0, %v1808
        %1810 = vdwg.mxu0
        %v1811 = vadd.f32 %v1659, %v1789
        %v1812 = vadd.f32 %v1660, %v1791
        %v1813 = vadd.f32 %v1661, %v1795
        %v1814 = vadd.f32 %v1662, %v1797
        %v1815 = vadd.f32 %v1663, %v1801
        %v1816 = vadd.f32 %v1664, %v1803
        %v1817 = vadd.f32 %v1665, %v1807
        %v1818 = vadd.f32 %v1666, %v1809
        %1819 = vrot.lane.b32.xlu0 %v569, 111
        %v1820 = vpop.permute.xlu0 %1819
        %1821 = vrot.lane.b32.xlu0 %v575, 111
        %v1822 = vpop.permute.xlu0 %1821
        %1823 = vrot.lane.b32.xlu0 %v585, 111
        %v1824 = vpop.permute.xlu0 %1823
        %1825 = vrot.lane.b32.xlu0 %v532, 111
        %v1826 = vpop.permute.xlu0 %1825
        %1827 = vrot.lane.b32.xlu0 %v570, 111
        %v1828 = vpop.permute.xlu0 %1827
        %1829 = vrot.lane.b32.xlu0 %v576, 111
        %v1830 = vpop.permute.xlu0 %1829
        %1831 = vrot.lane.b32.xlu0 %v586, 111
        %v1832 = vpop.permute.xlu0 %1831
        %1833 = vrot.lane.b32.xlu0 %v567, 111
        %v1834 = vpop.permute.xlu0 %1833
        %vm1835 = vcmp.lt.s32.totalorder %v409, 111
        %v1836 = vsel %vm1835, %v1820, %v1828
        %v1837 = vsel %vm1835, %v1822, %v1830
        %v1838 = vsel %vm1835, %v1824, %v1832
        %v1839 = vsel %vm1835, %v1826, %v1834
        %v1840 = vsel %vm1835, %v1828, %v1820
        %v1841 = vsel %vm1835, %v1830, %v1822
        %v1842 = vsel %vm1835, %v1832, %v1824
        %v1843 = vsel %vm1835, %v1834, %v1826
        %vm1844 = vmand %vm413, %vm931
        %vm1845 = vmand %vm414, %vm932
        %v1846 = vsel %vm1844, 1, 0
        %v1847 = vsel %vm1845, 1, 0
        %v1848 = vlaneseq
        %v1849 = vshrl.u32 %v1848, 7
        %v1850 = vsub.s32 0, %v1849
        %v1851 = vrot.slane %v1846, %v1850
        %v1852 = vlaneseq
        %v1853 = vshrl.u32 %v1852, 7
        %v1854 = vsub.s32 0, %v1853
        %v1855 = vrot.slane %v1847, %v1854
        %vm1856 = vcmp.eq.s32.totalorder %v1851, 1
        %vm1857 = vcmp.eq.s32.totalorder %v1855, 1
        %v1858 = vsel %vm1856, %v1836, 0.0
        %v1859 = vsel %vm1857, %v1840, 0.0
        %v1860 = vsel %vm1856, %v1837, 0.0
        %v1861 = vsel %vm1857, %v1841, 0.0
        %v1862 = vsel %vm1856, %v1838, 0.0
        %v1863 = vsel %vm1857, %v1842, 0.0
        %v1864 = vsel %vm1856, %v1839, 0.0
        %v1865 = vsel %vm1857, %v1843, 0.0
        %s1866 = scalar_lea.vmem [#allocation10], 256
        %v1867 = vld [vmem:[%s1866] sm:$0xff]
        %v1868 = vld [vmem:[%s1866 + $0x8] sm:$0xff]
        %v1869 = vld [vmem:[%s1866 + $0x10] sm:$0xff]
        %v1870 = vld [vmem:[%s1866 + $0x18] sm:$0xff]
        %v1872 = vsel %vm691, %v1867, 0
        %v1875 = vsel %vm691, %v1868, 0
        %v1878 = vsel %vm691, %v1869, 0
        %v1881 = vsel %vm691, %v1870, 0
        %v1884 = vsel %vm456, %v1864, 0
        %v1887 = vsel %vm456, %v1865, 0
        %1889 = vmatprep.subr.mxu0 %v1859
        %1890 = vmatpush1.msra.mxu0 %v1858
        %1891 = vmatprep.subr.mxu0 %v1861
        %1892 = vmatpush1.msra.mxu0 %v1860
        %1893 = vmatprep.subr.mxu0 %v1863
        %1894 = vmatpush1.msra.mxu0 %v1862
        %1895 = vmatprep.subr.mxu0 %v1887
        %1896 = vmatpush1.msra.mxu0 %v1884
        %1897 = vmatprep.subr.mxu0 0.0
        %1898 = vmatpush1.msra.mxu0 0.0
        %1899 = vmatprep.subr.mxu0 0.0
        %1900 = vmatpush1.msra.mxu0 0.0
        %1901 = vmatprep.subr.mxu0 0.0
        %1902 = vmatpush1.msra.mxu0 0.0
        %1903 = vmatprep.subr.mxu0 0.0
        %1904 = vmatpush1.msra.mxu0 0.0
        %1905 = vmatprep.subr.mxu0 0.0
        %1906 = vmatpush1.msra.mxu0 0.0
        %1907 = vmatprep.subr.mxu0 0.0
        %1908 = vmatpush1.msra.mxu0 0.0
        %1909 = vmatprep.subr.mxu0 0.0
        %1910 = vmatpush1.msra.mxu0 0.0
        %1911 = vmatprep.subr.mxu0 0.0
        %1912 = vmatpush1.msra.mxu0 0.0
        %1913 = vmatprep.subr.mxu0 0.0
        %1914 = vmatpush1.msra.mxu0 0.0
        %1915 = vmatprep.subr.mxu0 0.0
        %1916 = vmatpush1.msra.mxu0 0.0
        %1917 = vmatprep.subr.mxu0 0.0
        %1918 = vmatpush1.msra.mxu0 0.0
        %1919 = vmatprep.subr.mxu0 0.0
        %1920 = vmatpush1.msra.mxu0 0.0
        %1921 = vmatprep.subr.mxu0 0.0
        %1922 = vmatpush1.msra.mxu0 0.0
        %1923 = vmatprep.subr.mxu0 0.0
        %1924 = vmatpush1.msra.mxu0 0.0
        %1925 = vmatprep.subr.mxu0 0.0
        %1926 = vmatpush1.msra.mxu0 0.0
        %1927 = vmatprep.subr.mxu0 0.0
        %1928 = vmatpush1.msra.mxu0 0.0
        %1929 = vmatprep.subr.mxu0 0.0
        %1930 = vmatpush1.msra.mxu0 0.0
        %1931 = vmatprep.subr.mxu0 0.0
        %1932 = vmatpush1.msra.mxu0 0.0
        %1933 = vmatprep.subr.mxu0 0.0
        %1934 = vmatpush1.msra.mxu0 0.0
        %1935 = vmatprep.subr.mxu0 0.0
        %1936 = vmatpush1.msra.mxu0 0.0
        %1937 = vmatprep.subr.mxu0 0.0
        %1938 = vmatpush1.msra.mxu0 0.0
        %1939 = vmatprep.subr.mxu0 0.0
        %1940 = vmatpush1.msra.mxu0 0.0
        %1941 = vmatprep.subr.mxu0 0.0
        %1942 = vmatpush1.msra.mxu0 0.0
        %1943 = vmatprep.subr.mxu0 0.0
        %1944 = vmatpush1.msra.mxu0 0.0
        %1945 = vmatprep.subr.mxu0 0.0
        %1946 = vmatpush1.msra.mxu0 0.0
        %1947 = vmatprep.subr.mxu0 0.0
        %1948 = vmatpush1.msra.mxu0 0.0
        %1949 = vmatprep.subr.mxu0 0.0
        %1950 = vmatpush1.msra.mxu0 0.0
        %1951 = vmatprep.subr.mxu0 0.0
        %1952 = vmatpush1.msra.mxu0 0.0
        %1953 = vmatprep.mubr.f32.mxu0 0.0
        %1954 = vmatmul.mubr.f32.gmra.mrb[0].mxu0 %v1872
        %v1955 = vpop.f32.mrb[0].mxu0
        %v1956 = vadd.f32 0.0, %v1955
        %v1957 = vpop.f32.mrb[0].mxu0
        %v1958 = vadd.f32 0.0, %v1957
        %1959 = vmatprep.mubr.f32.mxu0 0.0
        %1960 = vmatmul.mubr.f32.gmra.mrb[0].mxu0 %v1875
        %v1961 = vpop.f32.mrb[0].mxu0
        %v1962 = vadd.f32 0.0, %v1961
        %v1963 = vpop.f32.mrb[0].mxu0
        %v1964 = vadd.f32 0.0, %v1963
        %1965 = vmatprep.mubr.f32.mxu0 0.0
        %1966 = vmatmul.mubr.f32.gmra.mrb[0].mxu0 %v1878
        %v1967 = vpop.f32.mrb[0].mxu0
        %v1968 = vadd.f32 0.0, %v1967
        %v1969 = vpop.f32.mrb[0].mxu0
        %v1970 = vadd.f32 0.0, %v1969
        %1971 = vmatprep.mubr.f32.mxu0 0.0
        %1972 = vmatmul.mubr.f32.gmra.mrb[0].mxu0 %v1881
        %v1973 = vpop.f32.mrb[0].mxu0
        %v1974 = vadd.f32 0.0, %v1973
        %v1975 = vpop.f32.mrb[0].mxu0
        %v1976 = vadd.f32 0.0, %v1975
        %1977 = vdwg.mxu0
        %v1978 = vadd.f32 %v1811, %v1956
        %v1979 = vadd.f32 %v1812, %v1958
        %v1980 = vadd.f32 %v1813, %v1962
        %v1981 = vadd.f32 %v1814, %v1964
        %v1982 = vadd.f32 %v1815, %v1968
        %v1983 = vadd.f32 %v1816, %v1970
        %v1984 = vadd.f32 %v1817, %v1974
        %v1985 = vadd.f32 %v1818, %v1976
        %v1986 = vld [vmem:[#allocation12] sm:$0xff]
        %v1987 = vld [vmem:[#allocation12 + $0x8] sm:$0xff]
        %v1988 = vld [vmem:[#allocation12 + $0x10] sm:$0xff]
        %v1989 = vld [vmem:[#allocation12 + $0x18] sm:$0xff]
        %1991 = vset.pattern.permute.xlu0 0
        %1992 = vperm.xlu0 %1991, %v1986
        %v1993 = vpop.permute.xlu0 %1992
        %1996 = vset.pattern.permute.xlu0 0
        %1997 = vperm.xlu0 %1996, %v1987
        %v1998 = vpop.permute.xlu0 %1997
        %2001 = vset.pattern.permute.xlu0 0
        %2002 = vperm.xlu0 %2001, %v1988
        %v2003 = vpop.permute.xlu0 %2002
        %2006 = vset.pattern.permute.xlu0 0
        %2007 = vperm.xlu0 %2006, %v1989
        %v2008 = vpop.permute.xlu0 %2007
        %v2010 = vadd.f32 %v1978, %v1993
        %v2011 = vadd.f32 %v1979, %v1993
        %v2012 = vadd.f32 %v1980, %v1998
        %v2013 = vadd.f32 %v1981, %v1998
        %v2014 = vadd.f32 %v1982, %v2003
        %v2015 = vadd.f32 %v1983, %v2003
        %v2016 = vadd.f32 %v1984, %v2008
        %v2017 = vadd.f32 %v1985, %v2008
        %v2018 = vmax.f32 %v2010, 0.0
        %v2019 = vmax.f32 %v2011, 0.0
        %v2020 = vmax.f32 %v2012, 0.0
        %v2021 = vmax.f32 %v2013, 0.0
        %v2022 = vmax.f32 %v2014, 0.0
        %v2023 = vmax.f32 %v2015, 0.0
        %v2024 = vmax.f32 %v2016, 0.0
        %v2025 = vmax.f32 %v2017, 0.0
        %v2026 = vld [vmem:[#allocation13] sm:$0x1f]
        %v2027 = vld [vmem:[#allocation15] sm:$0x1f]
        %2029 = vset.pattern.permute.xlu0 0
        %2030 = vperm.xlu0 %2029, %v2027
        %v2031 = vpop.permute.xlu0 %2030
        %vm2033 = vcmask 261120
        %v2035 = vsel %vm2033, %v2026, 0
        %2037 = vmatprep.subr.mxu0 %v2019
        %2038 = vmatpush1.msra.mxu0 %v2018
        %2039 = vmatprep.subr.mxu0 %v2021
        %2040 = vmatpush1.msra.mxu0 %v2020
        %2041 = vmatprep.subr.mxu0 %v2023
        %2042 = vmatpush1.msra.mxu0 %v2022
        %2043 = vmatprep.subr.mxu0 %v2025
        %2044 = vmatpush1.msra.mxu0 %v2024
        %2045 = vmatprep.subr.mxu0 0.0
        %2046 = vmatpush1.msra.mxu0 0.0
        %2047 = vmatprep.subr.mxu0 0.0
        %2048 = vmatpush1.msra.mxu0 0.0
        %2049 = vmatprep.subr.mxu0 0.0
        %2050 = vmatpush1.msra.mxu0 0.0
        %2051 = vmatprep.subr.mxu0 0.0
        %2052 = vmatpush1.msra.mxu0 0.0
        %2053 = vmatprep.subr.mxu0 0.0
        %2054 = vmatpush1.msra.mxu0 0.0
        %2055 = vmatprep.subr.mxu0 0.0
        %2056 = vmatpush1.msra.mxu0 0.0
        %2057 = vmatprep.subr.mxu0 0.0
        %2058 = vmatpush1.msra.mxu0 0.0
        %2059 = vmatprep.subr.mxu0 0.0
        %2060 = vmatpush1.msra.mxu0 0.0
        %2061 = vmatprep.subr.mxu0 0.0
        %2062 = vmatpush1.msra.mxu0 0.0
        %2063 = vmatprep.subr.mxu0 0.0
        %2064 = vmatpush1.msra.mxu0 0.0
        %2065 = vmatprep.subr.mxu0 0.0
        %2066 = vmatpush1.msra.mxu0 0.0
        %2067 = vmatprep.subr.mxu0 0.0
        %2068 = vmatpush1.msra.mxu0 0.0
        %2069 = vmatprep.subr.mxu0 0.0
        %2070 = vmatpush1.msra.mxu0 0.0
        %2071 = vmatprep.subr.mxu0 0.0
        %2072 = vmatpush1.msra.mxu0 0.0
        %2073 = vmatprep.subr.mxu0 0.0
        %2074 = vmatpush1.msra.mxu0 0.0
        %2075 = vmatprep.subr.mxu0 0.0
        %2076 = vmatpush1.msra.mxu0 0.0
        %2077 = vmatprep.subr.mxu0 0.0
        %2078 = vmatpush1.msra.mxu0 0.0
        %2079 = vmatprep.subr.mxu0 0.0
        %2080 = vmatpush1.msra.mxu0 0.0
        %2081 = vmatprep.subr.mxu0 0.0
        %2082 = vmatpush1.msra.mxu0 0.0
        %2083 = vmatprep.subr.mxu0 0.0
        %2084 = vmatpush1.msra.mxu0 0.0
        %2085 = vmatprep.subr.mxu0 0.0
        %2086 = vmatpush1.msra.mxu0 0.0
        %2087 = vmatprep.subr.mxu0 0.0
        %2088 = vmatpush1.msra.mxu0 0.0
        %2089 = vmatprep.subr.mxu0 0.0
        %2090 = vmatpush1.msra.mxu0 0.0
        %2091 = vmatprep.subr.mxu0 0.0
        %2092 = vmatpush1.msra.mxu0 0.0
        %2093 = vmatprep.subr.mxu0 0.0
        %2094 = vmatpush1.msra.mxu0 0.0
        %2095 = vmatprep.subr.mxu0 0.0
        %2096 = vmatpush1.msra.mxu0 0.0
        %2097 = vmatprep.subr.mxu0 0.0
        %2098 = vmatpush1.msra.mxu0 0.0
        %2099 = vmatprep.subr.mxu0 0.0
        %2100 = vmatpush1.msra.mxu0 0.0
        %2101 = vmatprep.mubr.f32.mxu0 0.0
        %2102 = vmatmul.mubr.f32.gmra.mrb[0].mxu0 %v2035
        %v2103 = vpop.f32.mrb[0].mxu0
        %v2104 = vadd.f32 %v2031, %v2103
        %v2105 = vpop.f32.mrb[0].mxu0
        %v2106 = vadd.f32 %v2031, %v2105
        %2107 = vdwg.mxu0
        %v2108 = vrcp.pop 10.0
        %v2109 = vmul.f32 %v2104, %v2108
        %v2110 = vmul.f32 %v2106, %v2108
        %v2111 = vtanh.pop %v2109
        %v2112 = vtanh.pop %v2110
        %v2113 = vmul.f32 %v2111, 10.0
        %v2114 = vmul.f32 %v2112, 10.0
        %v2115 = vxor.u32 %v2104, 2147483648
        %v2116 = vxor.u32 %v2106, 2147483648
        %v2117 = vmul.f32 %v2115, 1.442695
        %v2118 = vpow.pop %v2117
        %v2119 = vmul.f32 %v2116, 1.442695
        %v2120 = vpow.pop %v2119
        %v2121 = vadd.f32 %v2118, 1.0
        %v2122 = vadd.f32 %v2120, 1.0
        %v2123 = vrcp.pop %v2121
        %v2124 = vmul.f32 1.0, %v2123
        %v2125 = vrcp.pop %v2122
        %v2126 = vmul.f32 1.0, %v2125
        %v2127 = vlaneseq
        %v2128 = vshrl.u32 %v2127, 7
        %v2129 = vsub.s32 3, %v2128
        %v2130 = vrot.slane %v2124, %v2129
        %v2131 = vlaneseq
        %v2132 = vshrl.u32 %v2131, 7
        %v2133 = vsub.s32 3, %v2132
        %v2134 = vrot.slane %v2126, %v2133
        %v2135 = vmul.f32 %v2113, %v2130
        %v2136 = vmul.f32 %v2114, %v2134
        %v2137 = vlaneseq
        %v2138 = vshrl.u32 %v2137, 7
        %v2139 = vsub.s32 4, %v2138
        %v2140 = vrot.slane %v2124, %v2139
        %v2141 = vlaneseq
        %v2142 = vshrl.u32 %v2141, 7
        %v2143 = vsub.s32 4, %v2142
        %v2144 = vrot.slane %v2126, %v2143
        %v2147 = vcombine.low %v2140, %v2144
        %v2149 = vmul.f32 %v406, %v2147
        %v2151 = vcombine.high %v2149, %v2149
        %v2153 = vadd.f32 %v2135, %v2149
        %v2154 = vadd.f32 %v2136, %v2151
        %v2157 = vcombine.low %v2153, %v2154
        %2159 = vst [vmem:[%s403] sm:$0x77] %v2157
        %s2160 = sand.u32 %s199, 1
        %s2161 = scalar_lea.sflag [#allocation6], %s2160
        %s2162 = sand.u32 %s199, 1
        %s2163 = smul.addr %s2162, 8
        %s2164 = scalar_lea.vmem [#allocation16], %s2163
        // Predicated region
        $region77: #{tpu_custom_call.1} parent=47 // pred_check
          %p2165 = pneg %p209
        $region78: #{tpu_custom_call.1} parent=47 // pred_check_branch
          %2167 = sbr.rel (%p2165) target = $region80
        $region79: #{tpu_custom_call.1} parent=47 // pred_region
          %s2169 = ssub.s32 128, 128
          %2170 = vsyncadd %s2161, %s2169
          %s2171 = smul.addr %s34, 2
          %s2172 = smul.addr %s2171, 64
          %s2173 = scalar_lea.hbm %s8, %s2172
          %s2175 = sshll.u32 %s2164, 4
          %s2176 = int_to_ptr.vmem [resolvable:$true] %s2175
          %2178 = dma.vmem_to_hbm [thread:$0]  %s2176, 128, %s2173, %s2161
        $region80: #{tpu_custom_call.1} parent=47 // pred_fallthru
          _
      $region48: #{tpu_custom_call.1} parent=5 // pred_fallthru
        _
      %p2179 = scmp.le.s32.totalorder 2, %s29
      // Predicated region
      $region81: #{tpu_custom_call.1} parent=5 // pred_check
        %p2180 = pneg %p2179
      $region82: #{tpu_custom_call.1} parent=5 // pred_check_branch
        %2182 = sbr.rel (%p2180) target = $region84
      $region83: #{tpu_custom_call.1} parent=5 // pred_region
        %s2183 = ssub.s32 %s29, 2
        // Predicated region
        $region85: #{tpu_custom_call.1} parent=83 // pred_check
          %p2184 = pneg %p215
        $region86: #{tpu_custom_call.1} parent=83 // pred_check_branch
          %2186 = sbr.rel (%p2184) target = $region88
        $region87: #{tpu_custom_call.1} parent=83 // pred_region
          %s2187 = sand.u32 %s200, 1
          %s2188 = scalar_lea.sflag [#allocation6], %s2187
          %s2189 = sand.u32 %s200, 1
          %s2190 = smul.addr %s2189, 8
          %s2191 = scalar_lea.vmem [#allocation16], %s2190
          %2192 = dma.done %s2188, 128
        $region88: #{tpu_custom_call.1} parent=83 // pred_fallthru
          _
      $region84: #{tpu_custom_call.1} parent=5 // pred_fallthru
        _
    $region6: #{tpu_custom_call.1} parent=1 // loop_footer
      %s33 = sadd.s32 1, %s29
    $region7: #{tpu_custom_call.1} parent=1 // loop_footer_branch
      %28 = sbr.rel target = $region3
    $region8: #{tpu_custom_call.1} parent=1 // loop_exit
      _
    %2193 = vsyncpa [#allocation5], 1
    %s2194 = scalar_lea.sflag [#allocation5], 1
    %2195 = vsyncpa %s2194, 1
    %2196 = vsyncpa [#allocation8], 1
    %s2197 = scalar_lea.sflag [#allocation8], 1
    %2198 = vsyncpa %s2197, 1
    %2199 = vsyncpa [#allocation11], 1
    %2200 = vsyncpa [#allocation14], 1
    %2201 = vsyncpa [#allocation6], 1
    %s2202 = scalar_lea.sflag [#allocation6], 1
    %2203 = vsyncpa %s2202, 1

</llo_original>
